<compile_context>
chip_gen: v7x
topology: tpu7x:2x2x1
jax: 0.10.0
libtpu: 0.0.40
codegen_flags: <defaults>
</compile_context>

<pallas_src>
import functools

import jax
import jax.numpy as jnp
from jax.experimental import pallas as pl
from jax.experimental.pallas import tpu as pltpu


def _make_lstm_kernel(n_layers, seq_len, b_pad, hidden_dim):
    """Fused multi-layer LSTM kernel (single grid step).

    Ref order: x2d, (w_ih_T, w_hh_T, bias) * n_layers, h_out, c_out.
    """
    H = hidden_dim

    def kernel(*refs):
        x_ref = refs[0]
        w_refs = refs[1:1 + 3 * n_layers]
        h_out_ref = refs[1 + 3 * n_layers]
        c_out_ref = refs[2 + 3 * n_layers]

        # Layer input, flattened time-major: row index = t * b_pad + b.
        # bf16 MXU operands, f32 accumulation.
        x = x_ref[...]

        for l in range(n_layers):
            w_ih_t = w_refs[3 * l][...]      # (In_l, 4H) bf16
            w_hh_t = w_refs[3 * l + 1][...]  # (H,    4H) bf16
            bias = w_refs[3 * l + 2][...]    # (1,    4H) f32

            # Hoisted input projection: one large MXU matmul over the whole
            # sequence; only the recurrent matmul stays on the serial path.
            xproj = jnp.dot(x, w_ih_t,
                            preferred_element_type=jnp.float32) + bias

            h = jnp.zeros((b_pad, H), jnp.float32)
            c = jnp.zeros((b_pad, H), jnp.float32)
            hs = []
            for t in range(seq_len):  # fully unrolled; S is small and static
                gates = xproj[t * b_pad:(t + 1) * b_pad, :] + jnp.dot(
                    h.astype(jnp.bfloat16), w_hh_t,
                    preferred_element_type=jnp.float32)
                # PyTorch gate order (i, f, g, o); sigmoid as a single EUP
                # tanh: sigmoid(x) = 0.5*tanh(0.5*x) + 0.5 (exact identity).
                i_g = 0.5 * jnp.tanh(0.5 * gates[:, 0 * H:1 * H]) + 0.5
                f_g = 0.5 * jnp.tanh(0.5 * gates[:, 1 * H:2 * H]) + 0.5
                g_g = jnp.tanh(gates[:, 2 * H:3 * H])
                o_g = 0.5 * jnp.tanh(0.5 * gates[:, 3 * H:4 * H]) + 0.5
                c = f_g * c + i_g * g_g
                h = o_g * jnp.tanh(c)
                hs.append(h)

            if l + 1 < n_layers:
                # Next layer's input stays on-chip; no HBM round-trip.
                x = jnp.concatenate(hs, axis=0).astype(jnp.bfloat16)

            h_out_ref[l] = h
            c_out_ref[l] = c

    return kernel


def lstm_stack_pallas(x_tm, layers):
    """x_tm: (S, B, E) f32 time-major embedded inputs.

    Returns (h, c), each (n_layers, B, H) f32, matching nn.LSTM final states.
    """
    S, B, E = x_tm.shape
    H = layers[0]["w_hh"].shape[1]
    n_layers = len(layers)

    # Pad batch to the sublane height so every vreg row is used and all
    # in-kernel slicing stays (8, 128)-tile aligned.
    Bp = max(8, ((B + 7) // 8) * 8)
    x_pad = jnp.pad(x_tm, ((0, 0), (0, Bp - B), (0, 0)))
    x2d = x_pad.reshape(S * Bp, E).astype(jnp.bfloat16)

    args = [x2d]
    in_specs = [pl.BlockSpec((S * Bp, E), lambda i: (0, 0))]
    for p in layers:
        w_ih_t = jnp.asarray(p["w_ih"].T, jnp.bfloat16)   # (In, 4H)
        w_hh_t = jnp.asarray(p["w_hh"].T, jnp.bfloat16)   # (H, 4H)
        bias = (p["b_ih"] + p["b_hh"]).reshape(1, 4 * H).astype(jnp.float32)
        args += [w_ih_t, w_hh_t, bias]
        in_specs += [
            pl.BlockSpec(tuple(w_ih_t.shape), lambda i: (0, 0)),
            pl.BlockSpec((H, 4 * H), lambda i: (0, 0)),
            pl.BlockSpec((1, 4 * H), lambda i: (0, 0)),
        ]

    kernel = _make_lstm_kernel(n_layers, S, Bp, H)
    h_pad, c_pad = pl.pallas_call(
        kernel,
        out_shape=(
            jax.ShapeDtypeStruct((n_layers, Bp, H), jnp.float32),
            jax.ShapeDtypeStruct((n_layers, Bp, H), jnp.float32),
        ),
        grid_spec=pltpu.PrefetchScalarGridSpec(
            num_scalar_prefetch=0,
            grid=(1,),
            in_specs=in_specs,
            out_specs=[
                pl.BlockSpec((n_layers, Bp, H), lambda i: (0, 0, 0)),
                pl.BlockSpec((n_layers, Bp, H), lambda i: (0, 0, 0)),
            ],
        ),
        compiler_params=pltpu.CompilerParams(
            dimension_semantics=("arbitrary",)),
    )(*args)
    return h_pad[:, :B, :], c_pad[:, :B, :]


def init_params(key, vocab_size, embedding_dim, hidden_dim, n_layers):
    """Deterministic parameter init mirroring PyTorch shapes."""
    keys = jax.random.split(key, 1 + 4 * n_layers)
    params = {"embedding": jax.random.normal(
        keys[0], (vocab_size, embedding_dim), jnp.float32)}
    k = 1.0 / jnp.sqrt(hidden_dim)
    layers = []
    for l in range(n_layers):
        in_dim = embedding_dim if l == 0 else hidden_dim
        kw = keys[1 + 4 * l: 1 + 4 * (l + 1)]
        layers.append({
            "w_ih": jax.random.uniform(kw[0], (4 * hidden_dim, in_dim),
                                       jnp.float32, -k, k),
            "w_hh": jax.random.uniform(kw[1], (4 * hidden_dim, hidden_dim),
                                       jnp.float32, -k, k),
            "b_ih": jax.random.uniform(kw[2], (4 * hidden_dim,),
                                       jnp.float32, -k, k),
            "b_hh": jax.random.uniform(kw[3], (4 * hidden_dim,),
                                       jnp.float32, -k, k),
        })
    params["layers"] = layers
    return params


@functools.partial(jax.jit, static_argnames=("n_layers",))
def lstm_encoder_forward(params, src, n_layers):
    """src: (B, S) int32 token ids -> (h, c), each (n_layers, B, H)."""
    embedded = jnp.take(params["embedding"], src, axis=0)        # (B, S, E)
    # TODO(synk): nn.Dropout and inter-layer LSTM dropout are identity at
    #             inference; training-mode dropout is omitted.
    x_tm = jnp.transpose(embedded, (1, 0, 2))                    # (S, B, E)
    return lstm_stack_pallas(x_tm, params["layers"][:n_layers])


def _lstm_reference(params, src):
    """Pure-JAX f32 reference matching torch.nn.LSTM semantics."""
    emb = jnp.take(params["embedding"], src, axis=0)             # (B, S, E)
    x = jnp.transpose(emb, (1, 0, 2))                            # (S, B, E)
    hs, cs = [], []
    for p in params["layers"]:
        H = p["w_hh"].shape[1]
        B = x.shape[1]
        h = jnp.zeros((B, H), jnp.float32)
        c = jnp.zeros((B, H), jnp.float32)
        outs = []
        for t in range(x.shape[0]):
            gates = (x[t] @ p["w_ih"].T + h @ p["w_hh"].T
                     + p["b_ih"] + p["b_hh"])
            i = jax.nn.sigmoid(gates[:, :H])
            f = jax.nn.sigmoid(gates[:, H:2 * H])
            g = jnp.tanh(gates[:, 2 * H:3 * H])
            o = jax.nn.sigmoid(gates[:, 3 * H:])
            c = f * c + i * g
            h = o * jnp.tanh(c)
            outs.append(h)
        x = jnp.stack(outs, axis=0)
        hs.append(h)
        cs.append(c)
    return jnp.stack(hs, 0), jnp.stack(cs, 0)


if __name__ == "__main__":
    vocab_size = 50
    embedding_dim = 16
    hidden_dim = 32
    n_layers = 2
    batch = 2
    seq_len = 8

    key = jax.random.PRNGKey(0)
    pkey, dkey = jax.random.split(key)
    params = init_params(pkey, vocab_size, embedding_dim, hidden_dim, n_layers)
    src = jax.random.randint(dkey, (batch, seq_len), 0, vocab_size, jnp.int32)

    h, c = lstm_encoder_forward(params, src, n_layers=n_layers)
    jax.block_until_ready((h, c))

    assert h.shape == (n_layers, batch, hidden_dim)
    assert c.shape == (n_layers, batch, hidden_dim)

    # Loose tolerance: kernel uses bf16 MXU operands (f32 accumulation + f32
    # elementwise gate math), reference is pure f32.
    h_ref, c_ref = _lstm_reference(params, src)
    err = max(float(jnp.max(jnp.abs(h - h_ref))),
              float(jnp.max(jnp.abs(c - c_ref))))
    assert err < 5e-2, f"mismatch vs reference: {err}"

    print("KERNEL_OK")
</pallas_src>

<mosaic_0001>
module attributes {stable_mosaic.version = 11 : i64} {
  func.func @kernel(%arg0: i32, %arg1: memref<64x16xbf16, #tpu.memory_space<vmem>>, %arg2: memref<16x128xbf16, #tpu.memory_space<vmem>>, %arg3: memref<32x128xbf16, #tpu.memory_space<vmem>>, %arg4: memref<1x128xf32, #tpu.memory_space<vmem>>, %arg5: memref<32x128xbf16, #tpu.memory_space<vmem>>, %arg6: memref<32x128xbf16, #tpu.memory_space<vmem>>, %arg7: memref<1x128xf32, #tpu.memory_space<vmem>>, %arg8: memref<2x8x32xf32, #tpu.memory_space<vmem>>, %arg9: memref<2x8x32xf32, #tpu.memory_space<vmem>>) attributes {dimension_semantics = [#tpu.dimension_semantics<arbitrary>], iteration_bounds = array<i64: 1>, scalar_prefetch = 0 : i64, scratch_operands = 0 : i64, tpu.core_type = #tpu.core_type<tc>, window_params = [{pipeline_mode = #tpu.pipeline_mode<synchronous>, transform_indices = @transform_0, window_bounds = array<i64: 64, 16>}, {pipeline_mode = #tpu.pipeline_mode<synchronous>, transform_indices = @transform_1, window_bounds = array<i64: 16, 128>}, {pipeline_mode = #tpu.pipeline_mode<synchronous>, transform_indices = @transform_2, window_bounds = array<i64: 32, 128>}, {pipeline_mode = #tpu.pipeline_mode<synchronous>, transform_indices = @transform_3, window_bounds = array<i64: 1, 128>}, {pipeline_mode = #tpu.pipeline_mode<synchronous>, transform_indices = @transform_4, window_bounds = array<i64: 32, 128>}, {pipeline_mode = #tpu.pipeline_mode<synchronous>, transform_indices = @transform_5, window_bounds = array<i64: 32, 128>}, {pipeline_mode = #tpu.pipeline_mode<synchronous>, transform_indices = @transform_6, window_bounds = array<i64: 1, 128>}, {pipeline_mode = #tpu.pipeline_mode<synchronous>, transform_indices = @transform_7, window_bounds = array<i64: 2, 8, 32>}, {pipeline_mode = #tpu.pipeline_mode<synchronous>, transform_indices = @transform_8, window_bounds = array<i64: 2, 8, 32>}]} {
    %c0 = arith.constant 0 : index
    %c0_0 = arith.constant 0 : index
    %0 = vector.load %arg1[%c0, %c0_0] : memref<64x16xbf16, #tpu.memory_space<vmem>>, vector<64x16xbf16>
    %c0_1 = arith.constant 0 : index
    %c0_2 = arith.constant 0 : index
    %1 = vector.load %arg2[%c0_1, %c0_2] : memref<16x128xbf16, #tpu.memory_space<vmem>>, vector<16x128xbf16>
    %c0_3 = arith.constant 0 : index
    %c0_4 = arith.constant 0 : index
    %2 = vector.load %arg3[%c0_3, %c0_4] : memref<32x128xbf16, #tpu.memory_space<vmem>>, vector<32x128xbf16>
    %c0_5 = arith.constant 0 : index
    %c0_6 = arith.constant 0 : index
    %3 = vector.load %arg4[%c0_5, %c0_6] : memref<1x128xf32, #tpu.memory_space<vmem>>, vector<1x128xf32>
    %cst = arith.constant dense<0.000000e+00> : vector<64x128xf32>
    %4 = tpu.matmul %0, %1, %cst {dimension_numbers = #tpu.dot_dimension_numbers<[1], [0], [0], [1], [0, 0, 1, 1], [], []>} : vector<64x16xbf16>, vector<16x128xbf16>, vector<64x128xf32> -> vector<64x128xf32>
    %5 = vector.broadcast %3 : vector<1x128xf32> to vector<64x128xf32>
    %6 = arith.addf %4, %5 : vector<64x128xf32>
    %cst_7 = arith.constant 0.000000e+00 : f32
    %7 = vector.broadcast %cst_7 : f32 to vector<8x32xf32>
    %cst_8 = arith.constant 0.000000e+00 : f32
    %8 = vector.broadcast %cst_8 : f32 to vector<8x32xf32>
    %9 = vector.extract_strided_slice %6 {offsets = [0, 0], sizes = [8, 128], strides = [1, 1]} : vector<64x128xf32> to vector<8x128xf32>
    %10 = arith.truncf %7 : vector<8x32xf32> to vector<8x32xbf16>
    %cst_9 = arith.constant dense<0.000000e+00> : vector<8x128xf32>
    %11 = tpu.matmul %10, %2, %cst_9 {dimension_numbers = #tpu.dot_dimension_numbers<[1], [0], [0], [1], [0, 0, 1, 1], [], []>} : vector<8x32xbf16>, vector<32x128xbf16>, vector<8x128xf32> -> vector<8x128xf32>
    %12 = arith.addf %9, %11 : vector<8x128xf32>
    %13 = vector.extract_strided_slice %12 {offsets = [0, 0], sizes = [8, 32], strides = [1, 1]} : vector<8x128xf32> to vector<8x32xf32>
    %cst_10 = arith.constant 5.000000e-01 : f32
    %14 = vector.broadcast %cst_10 : f32 to vector<8x32xf32>
    %15 = arith.mulf %14, %13 : vector<8x32xf32>
    %16 = math.tanh %15 : vector<8x32xf32>
    %cst_11 = arith.constant 5.000000e-01 : f32
    %17 = vector.broadcast %cst_11 : f32 to vector<8x32xf32>
    %18 = arith.mulf %17, %16 : vector<8x32xf32>
    %cst_12 = arith.constant 5.000000e-01 : f32
    %19 = vector.broadcast %cst_12 : f32 to vector<8x32xf32>
    %20 = arith.addf %18, %19 : vector<8x32xf32>
    %21 = vector.extract_strided_slice %12 {offsets = [0, 32], sizes = [8, 32], strides = [1, 1]} : vector<8x128xf32> to vector<8x32xf32>
    %cst_13 = arith.constant 5.000000e-01 : f32
    %22 = vector.broadcast %cst_13 : f32 to vector<8x32xf32>
    %23 = arith.mulf %22, %21 : vector<8x32xf32>
    %24 = math.tanh %23 : vector<8x32xf32>
    %cst_14 = arith.constant 5.000000e-01 : f32
    %25 = vector.broadcast %cst_14 : f32 to vector<8x32xf32>
    %26 = arith.mulf %25, %24 : vector<8x32xf32>
    %cst_15 = arith.constant 5.000000e-01 : f32
    %27 = vector.broadcast %cst_15 : f32 to vector<8x32xf32>
    %28 = arith.addf %26, %27 : vector<8x32xf32>
    %29 = vector.extract_strided_slice %12 {offsets = [0, 64], sizes = [8, 32], strides = [1, 1]} : vector<8x128xf32> to vector<8x32xf32>
    %30 = math.tanh %29 : vector<8x32xf32>
    %31 = vector.extract_strided_slice %12 {offsets = [0, 96], sizes = [8, 32], strides = [1, 1]} : vector<8x128xf32> to vector<8x32xf32>
    %cst_16 = arith.constant 5.000000e-01 : f32
    %32 = vector.broadcast %cst_16 : f32 to vector<8x32xf32>
    %33 = arith.mulf %32, %31 : vector<8x32xf32>
    %34 = math.tanh %33 : vector<8x32xf32>
    %cst_17 = arith.constant 5.000000e-01 : f32
    %35 = vector.broadcast %cst_17 : f32 to vector<8x32xf32>
    %36 = arith.mulf %35, %34 : vector<8x32xf32>
    %cst_18 = arith.constant 5.000000e-01 : f32
    %37 = vector.broadcast %cst_18 : f32 to vector<8x32xf32>
    %38 = arith.addf %36, %37 : vector<8x32xf32>
    %39 = arith.mulf %28, %8 : vector<8x32xf32>
    %40 = arith.mulf %20, %30 : vector<8x32xf32>
    %41 = arith.addf %39, %40 : vector<8x32xf32>
    %42 = math.tanh %41 : vector<8x32xf32>
    %43 = arith.mulf %38, %42 : vector<8x32xf32>
    %44 = vector.extract_strided_slice %6 {offsets = [8, 0], sizes = [8, 128], strides = [1, 1]} : vector<64x128xf32> to vector<8x128xf32>
    %45 = arith.truncf %43 : vector<8x32xf32> to vector<8x32xbf16>
    %cst_19 = arith.constant dense<0.000000e+00> : vector<8x128xf32>
    %46 = tpu.matmul %45, %2, %cst_19 {dimension_numbers = #tpu.dot_dimension_numbers<[1], [0], [0], [1], [0, 0, 1, 1], [], []>} : vector<8x32xbf16>, vector<32x128xbf16>, vector<8x128xf32> -> vector<8x128xf32>
    %47 = arith.addf %44, %46 : vector<8x128xf32>
    %48 = vector.extract_strided_slice %47 {offsets = [0, 0], sizes = [8, 32], strides = [1, 1]} : vector<8x128xf32> to vector<8x32xf32>
    %cst_20 = arith.constant 5.000000e-01 : f32
    %49 = vector.broadcast %cst_20 : f32 to vector<8x32xf32>
    %50 = arith.mulf %49, %48 : vector<8x32xf32>
    %51 = math.tanh %50 : vector<8x32xf32>
    %cst_21 = arith.constant 5.000000e-01 : f32
    %52 = vector.broadcast %cst_21 : f32 to vector<8x32xf32>
    %53 = arith.mulf %52, %51 : vector<8x32xf32>
    %cst_22 = arith.constant 5.000000e-01 : f32
    %54 = vector.broadcast %cst_22 : f32 to vector<8x32xf32>
    %55 = arith.addf %53, %54 : vector<8x32xf32>
    %56 = vector.extract_strided_slice %47 {offsets = [0, 32], sizes = [8, 32], strides = [1, 1]} : vector<8x128xf32> to vector<8x32xf32>
    %cst_23 = arith.constant 5.000000e-01 : f32
    %57 = vector.broadcast %cst_23 : f32 to vector<8x32xf32>
    %58 = arith.mulf %57, %56 : vector<8x32xf32>
    %59 = math.tanh %58 : vector<8x32xf32>
    %cst_24 = arith.constant 5.000000e-01 : f32
    %60 = vector.broadcast %cst_24 : f32 to vector<8x32xf32>
    %61 = arith.mulf %60, %59 : vector<8x32xf32>
    %cst_25 = arith.constant 5.000000e-01 : f32
    %62 = vector.broadcast %cst_25 : f32 to vector<8x32xf32>
    %63 = arith.addf %61, %62 : vector<8x32xf32>
    %64 = vector.extract_strided_slice %47 {offsets = [0, 64], sizes = [8, 32], strides = [1, 1]} : vector<8x128xf32> to vector<8x32xf32>
    %65 = math.tanh %64 : vector<8x32xf32>
    %66 = vector.extract_strided_slice %47 {offsets = [0, 96], sizes = [8, 32], strides = [1, 1]} : vector<8x128xf32> to vector<8x32xf32>
    %cst_26 = arith.constant 5.000000e-01 : f32
    %67 = vector.broadcast %cst_26 : f32 to vector<8x32xf32>
    %68 = arith.mulf %67, %66 : vector<8x32xf32>
    %69 = math.tanh %68 : vector<8x32xf32>
    %cst_27 = arith.constant 5.000000e-01 : f32
    %70 = vector.broadcast %cst_27 : f32 to vector<8x32xf32>
    %71 = arith.mulf %70, %69 : vector<8x32xf32>
    %cst_28 = arith.constant 5.000000e-01 : f32
    %72 = vector.broadcast %cst_28 : f32 to vector<8x32xf32>
    %73 = arith.addf %71, %72 : vector<8x32xf32>
    %74 = arith.mulf %63, %41 : vector<8x32xf32>
    %75 = arith.mulf %55, %65 : vector<8x32xf32>
    %76 = arith.addf %74, %75 : vector<8x32xf32>
    %77 = math.tanh %76 : vector<8x32xf32>
    %78 = arith.mulf %73, %77 : vector<8x32xf32>
    %79 = vector.extract_strided_slice %6 {offsets = [16, 0], sizes = [8, 128], strides = [1, 1]} : vector<64x128xf32> to vector<8x128xf32>
    %80 = arith.truncf %78 : vector<8x32xf32> to vector<8x32xbf16>
    %cst_29 = arith.constant dense<0.000000e+00> : vector<8x128xf32>
    %81 = tpu.matmul %80, %2, %cst_29 {dimension_numbers = #tpu.dot_dimension_numbers<[1], [0], [0], [1], [0, 0, 1, 1], [], []>} : vector<8x32xbf16>, vector<32x128xbf16>, vector<8x128xf32> -> vector<8x128xf32>
    %82 = arith.addf %79, %81 : vector<8x128xf32>
    %83 = vector.extract_strided_slice %82 {offsets = [0, 0], sizes = [8, 32], strides = [1, 1]} : vector<8x128xf32> to vector<8x32xf32>
    %cst_30 = arith.constant 5.000000e-01 : f32
    %84 = vector.broadcast %cst_30 : f32 to vector<8x32xf32>
    %85 = arith.mulf %84, %83 : vector<8x32xf32>
    %86 = math.tanh %85 : vector<8x32xf32>
    %cst_31 = arith.constant 5.000000e-01 : f32
    %87 = vector.broadcast %cst_31 : f32 to vector<8x32xf32>
    %88 = arith.mulf %87, %86 : vector<8x32xf32>
    %cst_32 = arith.constant 5.000000e-01 : f32
    %89 = vector.broadcast %cst_32 : f32 to vector<8x32xf32>
    %90 = arith.addf %88, %89 : vector<8x32xf32>
    %91 = vector.extract_strided_slice %82 {offsets = [0, 32], sizes = [8, 32], strides = [1, 1]} : vector<8x128xf32> to vector<8x32xf32>
    %cst_33 = arith.constant 5.000000e-01 : f32
    %92 = vector.broadcast %cst_33 : f32 to vector<8x32xf32>
    %93 = arith.mulf %92, %91 : vector<8x32xf32>
    %94 = math.tanh %93 : vector<8x32xf32>
    %cst_34 = arith.constant 5.000000e-01 : f32
    %95 = vector.broadcast %cst_34 : f32 to vector<8x32xf32>
    %96 = arith.mulf %95, %94 : vector<8x32xf32>
    %cst_35 = arith.constant 5.000000e-01 : f32
    %97 = vector.broadcast %cst_35 : f32 to vector<8x32xf32>
    %98 = arith.addf %96, %97 : vector<8x32xf32>
    %99 = vector.extract_strided_slice %82 {offsets = [0, 64], sizes = [8, 32], strides = [1, 1]} : vector<8x128xf32> to vector<8x32xf32>
    %100 = math.tanh %99 : vector<8x32xf32>
    %101 = vector.extract_strided_slice %82 {offsets = [0, 96], sizes = [8, 32], strides = [1, 1]} : vector<8x128xf32> to vector<8x32xf32>
    %cst_36 = arith.constant 5.000000e-01 : f32
    %102 = vector.broadcast %cst_36 : f32 to vector<8x32xf32>
    %103 = arith.mulf %102, %101 : vector<8x32xf32>
    %104 = math.tanh %103 : vector<8x32xf32>
    %cst_37 = arith.constant 5.000000e-01 : f32
    %105 = vector.broadcast %cst_37 : f32 to vector<8x32xf32>
    %106 = arith.mulf %105, %104 : vector<8x32xf32>
    %cst_38 = arith.constant 5.000000e-01 : f32
    %107 = vector.broadcast %cst_38 : f32 to vector<8x32xf32>
    %108 = arith.addf %106, %107 : vector<8x32xf32>
    %109 = arith.mulf %98, %76 : vector<8x32xf32>
    %110 = arith.mulf %90, %100 : vector<8x32xf32>
    %111 = arith.addf %109, %110 : vector<8x32xf32>
    %112 = math.tanh %111 : vector<8x32xf32>
    %113 = arith.mulf %108, %112 : vector<8x32xf32>
    %114 = vector.extract_strided_slice %6 {offsets = [24, 0], sizes = [8, 128], strides = [1, 1]} : vector<64x128xf32> to vector<8x128xf32>
    %115 = arith.truncf %113 : vector<8x32xf32> to vector<8x32xbf16>
    %cst_39 = arith.constant dense<0.000000e+00> : vector<8x128xf32>
    %116 = tpu.matmul %115, %2, %cst_39 {dimension_numbers = #tpu.dot_dimension_numbers<[1], [0], [0], [1], [0, 0, 1, 1], [], []>} : vector<8x32xbf16>, vector<32x128xbf16>, vector<8x128xf32> -> vector<8x128xf32>
    %117 = arith.addf %114, %116 : vector<8x128xf32>
    %118 = vector.extract_strided_slice %117 {offsets = [0, 0], sizes = [8, 32], strides = [1, 1]} : vector<8x128xf32> to vector<8x32xf32>
    %cst_40 = arith.constant 5.000000e-01 : f32
    %119 = vector.broadcast %cst_40 : f32 to vector<8x32xf32>
    %120 = arith.mulf %119, %118 : vector<8x32xf32>
    %121 = math.tanh %120 : vector<8x32xf32>
    %cst_41 = arith.constant 5.000000e-01 : f32
    %122 = vector.broadcast %cst_41 : f32 to vector<8x32xf32>
    %123 = arith.mulf %122, %121 : vector<8x32xf32>
    %cst_42 = arith.constant 5.000000e-01 : f32
    %124 = vector.broadcast %cst_42 : f32 to vector<8x32xf32>
    %125 = arith.addf %123, %124 : vector<8x32xf32>
    %126 = vector.extract_strided_slice %117 {offsets = [0, 32], sizes = [8, 32], strides = [1, 1]} : vector<8x128xf32> to vector<8x32xf32>
    %cst_43 = arith.constant 5.000000e-01 : f32
    %127 = vector.broadcast %cst_43 : f32 to vector<8x32xf32>
    %128 = arith.mulf %127, %126 : vector<8x32xf32>
    %129 = math.tanh %128 : vector<8x32xf32>
    %cst_44 = arith.constant 5.000000e-01 : f32
    %130 = vector.broadcast %cst_44 : f32 to vector<8x32xf32>
    %131 = arith.mulf %130, %129 : vector<8x32xf32>
    %cst_45 = arith.constant 5.000000e-01 : f32
    %132 = vector.broadcast %cst_45 : f32 to vector<8x32xf32>
    %133 = arith.addf %131, %132 : vector<8x32xf32>
    %134 = vector.extract_strided_slice %117 {offsets = [0, 64], sizes = [8, 32], strides = [1, 1]} : vector<8x128xf32> to vector<8x32xf32>
    %135 = math.tanh %134 : vector<8x32xf32>
    %136 = vector.extract_strided_slice %117 {offsets = [0, 96], sizes = [8, 32], strides = [1, 1]} : vector<8x128xf32> to vector<8x32xf32>
    %cst_46 = arith.constant 5.000000e-01 : f32
    %137 = vector.broadcast %cst_46 : f32 to vector<8x32xf32>
    %138 = arith.mulf %137, %136 : vector<8x32xf32>
    %139 = math.tanh %138 : vector<8x32xf32>
    %cst_47 = arith.constant 5.000000e-01 : f32
    %140 = vector.broadcast %cst_47 : f32 to vector<8x32xf32>
    %141 = arith.mulf %140, %139 : vector<8x32xf32>
    %cst_48 = arith.constant 5.000000e-01 : f32
    %142 = vector.broadcast %cst_48 : f32 to vector<8x32xf32>
    %143 = arith.addf %141, %142 : vector<8x32xf32>
    %144 = arith.mulf %133, %111 : vector<8x32xf32>
    %145 = arith.mulf %125, %135 : vector<8x32xf32>
    %146 = arith.addf %144, %145 : vector<8x32xf32>
    %147 = math.tanh %146 : vector<8x32xf32>
    %148 = arith.mulf %143, %147 : vector<8x32xf32>
    %149 = vector.extract_strided_slice %6 {offsets = [32, 0], sizes = [8, 128], strides = [1, 1]} : vector<64x128xf32> to vector<8x128xf32>
    %150 = arith.truncf %148 : vector<8x32xf32> to vector<8x32xbf16>
    %cst_49 = arith.constant dense<0.000000e+00> : vector<8x128xf32>
    %151 = tpu.matmul %150, %2, %cst_49 {dimension_numbers = #tpu.dot_dimension_numbers<[1], [0], [0], [1], [0, 0, 1, 1], [], []>} : vector<8x32xbf16>, vector<32x128xbf16>, vector<8x128xf32> -> vector<8x128xf32>
    %152 = arith.addf %149, %151 : vector<8x128xf32>
    %153 = vector.extract_strided_slice %152 {offsets = [0, 0], sizes = [8, 32], strides = [1, 1]} : vector<8x128xf32> to vector<8x32xf32>
    %cst_50 = arith.constant 5.000000e-01 : f32
    %154 = vector.broadcast %cst_50 : f32 to vector<8x32xf32>
    %155 = arith.mulf %154, %153 : vector<8x32xf32>
    %156 = math.tanh %155 : vector<8x32xf32>
    %cst_51 = arith.constant 5.000000e-01 : f32
    %157 = vector.broadcast %cst_51 : f32 to vector<8x32xf32>
    %158 = arith.mulf %157, %156 : vector<8x32xf32>
    %cst_52 = arith.constant 5.000000e-01 : f32
    %159 = vector.broadcast %cst_52 : f32 to vector<8x32xf32>
    %160 = arith.addf %158, %159 : vector<8x32xf32>
    %161 = vector.extract_strided_slice %152 {offsets = [0, 32], sizes = [8, 32], strides = [1, 1]} : vector<8x128xf32> to vector<8x32xf32>
    %cst_53 = arith.constant 5.000000e-01 : f32
    %162 = vector.broadcast %cst_53 : f32 to vector<8x32xf32>
    %163 = arith.mulf %162, %161 : vector<8x32xf32>
    %164 = math.tanh %163 : vector<8x32xf32>
    %cst_54 = arith.constant 5.000000e-01 : f32
    %165 = vector.broadcast %cst_54 : f32 to vector<8x32xf32>
    %166 = arith.mulf %165, %164 : vector<8x32xf32>
    %cst_55 = arith.constant 5.000000e-01 : f32
    %167 = vector.broadcast %cst_55 : f32 to vector<8x32xf32>
    %168 = arith.addf %166, %167 : vector<8x32xf32>
    %169 = vector.extract_strided_slice %152 {offsets = [0, 64], sizes = [8, 32], strides = [1, 1]} : vector<8x128xf32> to vector<8x32xf32>
    %170 = math.tanh %169 : vector<8x32xf32>
    %171 = vector.extract_strided_slice %152 {offsets = [0, 96], sizes = [8, 32], strides = [1, 1]} : vector<8x128xf32> to vector<8x32xf32>
    %cst_56 = arith.constant 5.000000e-01 : f32
    %172 = vector.broadcast %cst_56 : f32 to vector<8x32xf32>
    %173 = arith.mulf %172, %171 : vector<8x32xf32>
    %174 = math.tanh %173 : vector<8x32xf32>
    %cst_57 = arith.constant 5.000000e-01 : f32
    %175 = vector.broadcast %cst_57 : f32 to vector<8x32xf32>
    %176 = arith.mulf %175, %174 : vector<8x32xf32>
    %cst_58 = arith.constant 5.000000e-01 : f32
    %177 = vector.broadcast %cst_58 : f32 to vector<8x32xf32>
    %178 = arith.addf %176, %177 : vector<8x32xf32>
    %179 = arith.mulf %168, %146 : vector<8x32xf32>
    %180 = arith.mulf %160, %170 : vector<8x32xf32>
    %181 = arith.addf %179, %180 : vector<8x32xf32>
    %182 = math.tanh %181 : vector<8x32xf32>
    %183 = arith.mulf %178, %182 : vector<8x32xf32>
    %184 = vector.extract_strided_slice %6 {offsets = [40, 0], sizes = [8, 128], strides = [1, 1]} : vector<64x128xf32> to vector<8x128xf32>
    %185 = arith.truncf %183 : vector<8x32xf32> to vector<8x32xbf16>
    %cst_59 = arith.constant dense<0.000000e+00> : vector<8x128xf32>
    %186 = tpu.matmul %185, %2, %cst_59 {dimension_numbers = #tpu.dot_dimension_numbers<[1], [0], [0], [1], [0, 0, 1, 1], [], []>} : vector<8x32xbf16>, vector<32x128xbf16>, vector<8x128xf32> -> vector<8x128xf32>
    %187 = arith.addf %184, %186 : vector<8x128xf32>
    %188 = vector.extract_strided_slice %187 {offsets = [0, 0], sizes = [8, 32], strides = [1, 1]} : vector<8x128xf32> to vector<8x32xf32>
    %cst_60 = arith.constant 5.000000e-01 : f32
    %189 = vector.broadcast %cst_60 : f32 to vector<8x32xf32>
    %190 = arith.mulf %189, %188 : vector<8x32xf32>
    %191 = math.tanh %190 : vector<8x32xf32>
    %cst_61 = arith.constant 5.000000e-01 : f32
    %192 = vector.broadcast %cst_61 : f32 to vector<8x32xf32>
    %193 = arith.mulf %192, %191 : vector<8x32xf32>
    %cst_62 = arith.constant 5.000000e-01 : f32
    %194 = vector.broadcast %cst_62 : f32 to vector<8x32xf32>
    %195 = arith.addf %193, %194 : vector<8x32xf32>
    %196 = vector.extract_strided_slice %187 {offsets = [0, 32], sizes = [8, 32], strides = [1, 1]} : vector<8x128xf32> to vector<8x32xf32>
    %cst_63 = arith.constant 5.000000e-01 : f32
    %197 = vector.broadcast %cst_63 : f32 to vector<8x32xf32>
    %198 = arith.mulf %197, %196 : vector<8x32xf32>
    %199 = math.tanh %198 : vector<8x32xf32>
    %cst_64 = arith.constant 5.000000e-01 : f32
    %200 = vector.broadcast %cst_64 : f32 to vector<8x32xf32>
    %201 = arith.mulf %200, %199 : vector<8x32xf32>
    %cst_65 = arith.constant 5.000000e-01 : f32
    %202 = vector.broadcast %cst_65 : f32 to vector<8x32xf32>
    %203 = arith.addf %201, %202 : vector<8x32xf32>
    %204 = vector.extract_strided_slice %187 {offsets = [0, 64], sizes = [8, 32], strides = [1, 1]} : vector<8x128xf32> to vector<8x32xf32>
    %205 = math.tanh %204 : vector<8x32xf32>
    %206 = vector.extract_strided_slice %187 {offsets = [0, 96], sizes = [8, 32], strides = [1, 1]} : vector<8x128xf32> to vector<8x32xf32>
    %cst_66 = arith.constant 5.000000e-01 : f32
    %207 = vector.broadcast %cst_66 : f32 to vector<8x32xf32>
    %208 = arith.mulf %207, %206 : vector<8x32xf32>
    %209 = math.tanh %208 : vector<8x32xf32>
    %cst_67 = arith.constant 5.000000e-01 : f32
    %210 = vector.broadcast %cst_67 : f32 to vector<8x32xf32>
    %211 = arith.mulf %210, %209 : vector<8x32xf32>
    %cst_68 = arith.constant 5.000000e-01 : f32
    %212 = vector.broadcast %cst_68 : f32 to vector<8x32xf32>
    %213 = arith.addf %211, %212 : vector<8x32xf32>
    %214 = arith.mulf %203, %181 : vector<8x32xf32>
    %215 = arith.mulf %195, %205 : vector<8x32xf32>
    %216 = arith.addf %214, %215 : vector<8x32xf32>
    %217 = math.tanh %216 : vector<8x32xf32>
    %218 = arith.mulf %213, %217 : vector<8x32xf32>
    %219 = vector.extract_strided_slice %6 {offsets = [48, 0], sizes = [8, 128], strides = [1, 1]} : vector<64x128xf32> to vector<8x128xf32>
    %220 = arith.truncf %218 : vector<8x32xf32> to vector<8x32xbf16>
    %cst_69 = arith.constant dense<0.000000e+00> : vector<8x128xf32>
    %221 = tpu.matmul %220, %2, %cst_69 {dimension_numbers = #tpu.dot_dimension_numbers<[1], [0], [0], [1], [0, 0, 1, 1], [], []>} : vector<8x32xbf16>, vector<32x128xbf16>, vector<8x128xf32> -> vector<8x128xf32>
    %222 = arith.addf %219, %221 : vector<8x128xf32>
    %223 = vector.extract_strided_slice %222 {offsets = [0, 0], sizes = [8, 32], strides = [1, 1]} : vector<8x128xf32> to vector<8x32xf32>
    %cst_70 = arith.constant 5.000000e-01 : f32
    %224 = vector.broadcast %cst_70 : f32 to vector<8x32xf32>
    %225 = arith.mulf %224, %223 : vector<8x32xf32>
    %226 = math.tanh %225 : vector<8x32xf32>
    %cst_71 = arith.constant 5.000000e-01 : f32
    %227 = vector.broadcast %cst_71 : f32 to vector<8x32xf32>
    %228 = arith.mulf %227, %226 : vector<8x32xf32>
    %cst_72 = arith.constant 5.000000e-01 : f32
    %229 = vector.broadcast %cst_72 : f32 to vector<8x32xf32>
    %230 = arith.addf %228, %229 : vector<8x32xf32>
    %231 = vector.extract_strided_slice %222 {offsets = [0, 32], sizes = [8, 32], strides = [1, 1]} : vector<8x128xf32> to vector<8x32xf32>
    %cst_73 = arith.constant 5.000000e-01 : f32
    %232 = vector.broadcast %cst_73 : f32 to vector<8x32xf32>
    %233 = arith.mulf %232, %231 : vector<8x32xf32>
    %234 = math.tanh %233 : vector<8x32xf32>
    %cst_74 = arith.constant 5.000000e-01 : f32
    %235 = vector.broadcast %cst_74 : f32 to vector<8x32xf32>
    %236 = arith.mulf %235, %234 : vector<8x32xf32>
    %cst_75 = arith.constant 5.000000e-01 : f32
    %237 = vector.broadcast %cst_75 : f32 to vector<8x32xf32>
    %238 = arith.addf %236, %237 : vector<8x32xf32>
    %239 = vector.extract_strided_slice %222 {offsets = [0, 64], sizes = [8, 32], strides = [1, 1]} : vector<8x128xf32> to vector<8x32xf32>
    %240 = math.tanh %239 : vector<8x32xf32>
    %241 = vector.extract_strided_slice %222 {offsets = [0, 96], sizes = [8, 32], strides = [1, 1]} : vector<8x128xf32> to vector<8x32xf32>
    %cst_76 = arith.constant 5.000000e-01 : f32
    %242 = vector.broadcast %cst_76 : f32 to vector<8x32xf32>
    %243 = arith.mulf %242, %241 : vector<8x32xf32>
    %244 = math.tanh %243 : vector<8x32xf32>
    %cst_77 = arith.constant 5.000000e-01 : f32
    %245 = vector.broadcast %cst_77 : f32 to vector<8x32xf32>
    %246 = arith.mulf %245, %244 : vector<8x32xf32>
    %cst_78 = arith.constant 5.000000e-01 : f32
    %247 = vector.broadcast %cst_78 : f32 to vector<8x32xf32>
    %248 = arith.addf %246, %247 : vector<8x32xf32>
    %249 = arith.mulf %238, %216 : vector<8x32xf32>
    %250 = arith.mulf %230, %240 : vector<8x32xf32>
    %251 = arith.addf %249, %250 : vector<8x32xf32>
    %252 = math.tanh %251 : vector<8x32xf32>
    %253 = arith.mulf %248, %252 : vector<8x32xf32>
    %254 = vector.extract_strided_slice %6 {offsets = [56, 0], sizes = [8, 128], strides = [1, 1]} : vector<64x128xf32> to vector<8x128xf32>
    %255 = arith.truncf %253 : vector<8x32xf32> to vector<8x32xbf16>
    %cst_79 = arith.constant dense<0.000000e+00> : vector<8x128xf32>
    %256 = tpu.matmul %255, %2, %cst_79 {dimension_numbers = #tpu.dot_dimension_numbers<[1], [0], [0], [1], [0, 0, 1, 1], [], []>} : vector<8x32xbf16>, vector<32x128xbf16>, vector<8x128xf32> -> vector<8x128xf32>
    %257 = arith.addf %254, %256 : vector<8x128xf32>
    %258 = vector.extract_strided_slice %257 {offsets = [0, 0], sizes = [8, 32], strides = [1, 1]} : vector<8x128xf32> to vector<8x32xf32>
    %cst_80 = arith.constant 5.000000e-01 : f32
    %259 = vector.broadcast %cst_80 : f32 to vector<8x32xf32>
    %260 = arith.mulf %259, %258 : vector<8x32xf32>
    %261 = math.tanh %260 : vector<8x32xf32>
    %cst_81 = arith.constant 5.000000e-01 : f32
    %262 = vector.broadcast %cst_81 : f32 to vector<8x32xf32>
    %263 = arith.mulf %262, %261 : vector<8x32xf32>
    %cst_82 = arith.constant 5.000000e-01 : f32
    %264 = vector.broadcast %cst_82 : f32 to vector<8x32xf32>
    %265 = arith.addf %263, %264 : vector<8x32xf32>
    %266 = vector.extract_strided_slice %257 {offsets = [0, 32], sizes = [8, 32], strides = [1, 1]} : vector<8x128xf32> to vector<8x32xf32>
    %cst_83 = arith.constant 5.000000e-01 : f32
    %267 = vector.broadcast %cst_83 : f32 to vector<8x32xf32>
    %268 = arith.mulf %267, %266 : vector<8x32xf32>
    %269 = math.tanh %268 : vector<8x32xf32>
    %cst_84 = arith.constant 5.000000e-01 : f32
    %270 = vector.broadcast %cst_84 : f32 to vector<8x32xf32>
    %271 = arith.mulf %270, %269 : vector<8x32xf32>
    %cst_85 = arith.constant 5.000000e-01 : f32
    %272 = vector.broadcast %cst_85 : f32 to vector<8x32xf32>
    %273 = arith.addf %271, %272 : vector<8x32xf32>
    %274 = vector.extract_strided_slice %257 {offsets = [0, 64], sizes = [8, 32], strides = [1, 1]} : vector<8x128xf32> to vector<8x32xf32>
    %275 = math.tanh %274 : vector<8x32xf32>
    %276 = vector.extract_strided_slice %257 {offsets = [0, 96], sizes = [8, 32], strides = [1, 1]} : vector<8x128xf32> to vector<8x32xf32>
    %cst_86 = arith.constant 5.000000e-01 : f32
    %277 = vector.broadcast %cst_86 : f32 to vector<8x32xf32>
    %278 = arith.mulf %277, %276 : vector<8x32xf32>
    %279 = math.tanh %278 : vector<8x32xf32>
    %cst_87 = arith.constant 5.000000e-01 : f32
    %280 = vector.broadcast %cst_87 : f32 to vector<8x32xf32>
    %281 = arith.mulf %280, %279 : vector<8x32xf32>
    %cst_88 = arith.constant 5.000000e-01 : f32
    %282 = vector.broadcast %cst_88 : f32 to vector<8x32xf32>
    %283 = arith.addf %281, %282 : vector<8x32xf32>
    %284 = arith.mulf %273, %251 : vector<8x32xf32>
    %285 = arith.mulf %265, %275 : vector<8x32xf32>
    %286 = arith.addf %284, %285 : vector<8x32xf32>
    %287 = math.tanh %286 : vector<8x32xf32>
    %288 = arith.mulf %283, %287 : vector<8x32xf32>
    %289 = tpu.concatenate %43, %78, %113, %148, %183, %218, %253, %288 in 0 : vector<8x32xf32>, vector<8x32xf32>, vector<8x32xf32>, vector<8x32xf32>, vector<8x32xf32>, vector<8x32xf32>, vector<8x32xf32>, vector<8x32xf32> -> vector<64x32xf32>
    %290 = arith.truncf %289 : vector<64x32xf32> to vector<64x32xbf16>
    %c0_89 = arith.constant 0 : index
    %c0_90 = arith.constant 0 : index
    %c0_91 = arith.constant 0 : index
    %291 = vector.load %arg8[%c0_89, %c0_90, %c0_91] : memref<2x8x32xf32, #tpu.memory_space<vmem>>, vector<1x8x32xf32>
    %292 = vector.shape_cast %291 : vector<1x8x32xf32> to vector<8x32xf32>
    %293 = vector.shape_cast %288 : vector<8x32xf32> to vector<1x8x32xf32>
    tpu.vector_store %arg8[%c0_89, %c0_90, %c0_91], %293 {strides = array<i32>} : memref<2x8x32xf32, #tpu.memory_space<vmem>>, vector<1x8x32xf32>,
    %c0_92 = arith.constant 0 : index
    %c0_93 = arith.constant 0 : index
    %c0_94 = arith.constant 0 : index
    %294 = vector.load %arg9[%c0_92, %c0_93, %c0_94] : memref<2x8x32xf32, #tpu.memory_space<vmem>>, vector<1x8x32xf32>
    %295 = vector.shape_cast %294 : vector<1x8x32xf32> to vector<8x32xf32>
    %296 = vector.shape_cast %286 : vector<8x32xf32> to vector<1x8x32xf32>
    tpu.vector_store %arg9[%c0_92, %c0_93, %c0_94], %296 {strides = array<i32>} : memref<2x8x32xf32, #tpu.memory_space<vmem>>, vector<1x8x32xf32>,
    %c0_95 = arith.constant 0 : index
    %c0_96 = arith.constant 0 : index
    %297 = vector.load %arg5[%c0_95, %c0_96] : memref<32x128xbf16, #tpu.memory_space<vmem>>, vector<32x128xbf16>
    %c0_97 = arith.constant 0 : index
    %c0_98 = arith.constant 0 : index
    %298 = vector.load %arg6[%c0_97, %c0_98] : memref<32x128xbf16, #tpu.memory_space<vmem>>, vector<32x128xbf16>
    %c0_99 = arith.constant 0 : index
    %c0_100 = arith.constant 0 : index
    %299 = vector.load %arg7[%c0_99, %c0_100] : memref<1x128xf32, #tpu.memory_space<vmem>>, vector<1x128xf32>
    %cst_101 = arith.constant dense<0.000000e+00> : vector<64x128xf32>
    %300 = tpu.matmul %290, %297, %cst_101 {dimension_numbers = #tpu.dot_dimension_numbers<[1], [0], [0], [1], [0, 0, 1, 1], [], []>} : vector<64x32xbf16>, vector<32x128xbf16>, vector<64x128xf32> -> vector<64x128xf32>
    %301 = vector.broadcast %299 : vector<1x128xf32> to vector<64x128xf32>
    %302 = arith.addf %300, %301 : vector<64x128xf32>
    %cst_102 = arith.constant 0.000000e+00 : f32
    %303 = vector.broadcast %cst_102 : f32 to vector<8x32xf32>
    %cst_103 = arith.constant 0.000000e+00 : f32
    %304 = vector.broadcast %cst_103 : f32 to vector<8x32xf32>
    %305 = vector.extract_strided_slice %302 {offsets = [0, 0], sizes = [8, 128], strides = [1, 1]} : vector<64x128xf32> to vector<8x128xf32>
    %306 = arith.truncf %303 : vector<8x32xf32> to vector<8x32xbf16>
    %cst_104 = arith.constant dense<0.000000e+00> : vector<8x128xf32>
    %307 = tpu.matmul %306, %298, %cst_104 {dimension_numbers = #tpu.dot_dimension_numbers<[1], [0], [0], [1], [0, 0, 1, 1], [], []>} : vector<8x32xbf16>, vector<32x128xbf16>, vector<8x128xf32> -> vector<8x128xf32>
    %308 = arith.addf %305, %307 : vector<8x128xf32>
    %309 = vector.extract_strided_slice %308 {offsets = [0, 0], sizes = [8, 32], strides = [1, 1]} : vector<8x128xf32> to vector<8x32xf32>
    %cst_105 = arith.constant 5.000000e-01 : f32
    %310 = vector.broadcast %cst_105 : f32 to vector<8x32xf32>
    %311 = arith.mulf %310, %309 : vector<8x32xf32>
    %312 = math.tanh %311 : vector<8x32xf32>
    %cst_106 = arith.constant 5.000000e-01 : f32
    %313 = vector.broadcast %cst_106 : f32 to vector<8x32xf32>
    %314 = arith.mulf %313, %312 : vector<8x32xf32>
    %cst_107 = arith.constant 5.000000e-01 : f32
    %315 = vector.broadcast %cst_107 : f32 to vector<8x32xf32>
    %316 = arith.addf %314, %315 : vector<8x32xf32>
    %317 = vector.extract_strided_slice %308 {offsets = [0, 32], sizes = [8, 32], strides = [1, 1]} : vector<8x128xf32> to vector<8x32xf32>
    %cst_108 = arith.constant 5.000000e-01 : f32
    %318 = vector.broadcast %cst_108 : f32 to vector<8x32xf32>
    %319 = arith.mulf %318, %317 : vector<8x32xf32>
    %320 = math.tanh %319 : vector<8x32xf32>
    %cst_109 = arith.constant 5.000000e-01 : f32
    %321 = vector.broadcast %cst_109 : f32 to vector<8x32xf32>
    %322 = arith.mulf %321, %320 : vector<8x32xf32>
    %cst_110 = arith.constant 5.000000e-01 : f32
    %323 = vector.broadcast %cst_110 : f32 to vector<8x32xf32>
    %324 = arith.addf %322, %323 : vector<8x32xf32>
    %325 = vector.extract_strided_slice %308 {offsets = [0, 64], sizes = [8, 32], strides = [1, 1]} : vector<8x128xf32> to vector<8x32xf32>
    %326 = math.tanh %325 : vector<8x32xf32>
    %327 = vector.extract_strided_slice %308 {offsets = [0, 96], sizes = [8, 32], strides = [1, 1]} : vector<8x128xf32> to vector<8x32xf32>
    %cst_111 = arith.constant 5.000000e-01 : f32
    %328 = vector.broadcast %cst_111 : f32 to vector<8x32xf32>
    %329 = arith.mulf %328, %327 : vector<8x32xf32>
    %330 = math.tanh %329 : vector<8x32xf32>
    %cst_112 = arith.constant 5.000000e-01 : f32
    %331 = vector.broadcast %cst_112 : f32 to vector<8x32xf32>
    %332 = arith.mulf %331, %330 : vector<8x32xf32>
    %cst_113 = arith.constant 5.000000e-01 : f32
    %333 = vector.broadcast %cst_113 : f32 to vector<8x32xf32>
    %334 = arith.addf %332, %333 : vector<8x32xf32>
    %335 = arith.mulf %324, %304 : vector<8x32xf32>
    %336 = arith.mulf %316, %326 : vector<8x32xf32>
    %337 = arith.addf %335, %336 : vector<8x32xf32>
    %338 = math.tanh %337 : vector<8x32xf32>
    %339 = arith.mulf %334, %338 : vector<8x32xf32>
    %340 = vector.extract_strided_slice %302 {offsets = [8, 0], sizes = [8, 128], strides = [1, 1]} : vector<64x128xf32> to vector<8x128xf32>
    %341 = arith.truncf %339 : vector<8x32xf32> to vector<8x32xbf16>
    %cst_114 = arith.constant dense<0.000000e+00> : vector<8x128xf32>
    %342 = tpu.matmul %341, %298, %cst_114 {dimension_numbers = #tpu.dot_dimension_numbers<[1], [0], [0], [1], [0, 0, 1, 1], [], []>} : vector<8x32xbf16>, vector<32x128xbf16>, vector<8x128xf32> -> vector<8x128xf32>
    %343 = arith.addf %340, %342 : vector<8x128xf32>
    %344 = vector.extract_strided_slice %343 {offsets = [0, 0], sizes = [8, 32], strides = [1, 1]} : vector<8x128xf32> to vector<8x32xf32>
    %cst_115 = arith.constant 5.000000e-01 : f32
    %345 = vector.broadcast %cst_115 : f32 to vector<8x32xf32>
    %346 = arith.mulf %345, %344 : vector<8x32xf32>
    %347 = math.tanh %346 : vector<8x32xf32>
    %cst_116 = arith.constant 5.000000e-01 : f32
    %348 = vector.broadcast %cst_116 : f32 to vector<8x32xf32>
    %349 = arith.mulf %348, %347 : vector<8x32xf32>
    %cst_117 = arith.constant 5.000000e-01 : f32
    %350 = vector.broadcast %cst_117 : f32 to vector<8x32xf32>
    %351 = arith.addf %349, %350 : vector<8x32xf32>
    %352 = vector.extract_strided_slice %343 {offsets = [0, 32], sizes = [8, 32], strides = [1, 1]} : vector<8x128xf32> to vector<8x32xf32>
    %cst_118 = arith.constant 5.000000e-01 : f32
    %353 = vector.broadcast %cst_118 : f32 to vector<8x32xf32>
    %354 = arith.mulf %353, %352 : vector<8x32xf32>
    %355 = math.tanh %354 : vector<8x32xf32>
    %cst_119 = arith.constant 5.000000e-01 : f32
    %356 = vector.broadcast %cst_119 : f32 to vector<8x32xf32>
    %357 = arith.mulf %356, %355 : vector<8x32xf32>
    %cst_120 = arith.constant 5.000000e-01 : f32
    %358 = vector.broadcast %cst_120 : f32 to vector<8x32xf32>
    %359 = arith.addf %357, %358 : vector<8x32xf32>
    %360 = vector.extract_strided_slice %343 {offsets = [0, 64], sizes = [8, 32], strides = [1, 1]} : vector<8x128xf32> to vector<8x32xf32>
    %361 = math.tanh %360 : vector<8x32xf32>
    %362 = vector.extract_strided_slice %343 {offsets = [0, 96], sizes = [8, 32], strides = [1, 1]} : vector<8x128xf32> to vector<8x32xf32>
    %cst_121 = arith.constant 5.000000e-01 : f32
    %363 = vector.broadcast %cst_121 : f32 to vector<8x32xf32>
    %364 = arith.mulf %363, %362 : vector<8x32xf32>
    %365 = math.tanh %364 : vector<8x32xf32>
    %cst_122 = arith.constant 5.000000e-01 : f32
    %366 = vector.broadcast %cst_122 : f32 to vector<8x32xf32>
    %367 = arith.mulf %366, %365 : vector<8x32xf32>
    %cst_123 = arith.constant 5.000000e-01 : f32
    %368 = vector.broadcast %cst_123 : f32 to vector<8x32xf32>
    %369 = arith.addf %367, %368 : vector<8x32xf32>
    %370 = arith.mulf %359, %337 : vector<8x32xf32>
    %371 = arith.mulf %351, %361 : vector<8x32xf32>
    %372 = arith.addf %370, %371 : vector<8x32xf32>
    %373 = math.tanh %372 : vector<8x32xf32>
    %374 = arith.mulf %369, %373 : vector<8x32xf32>
    %375 = vector.extract_strided_slice %302 {offsets = [16, 0], sizes = [8, 128], strides = [1, 1]} : vector<64x128xf32> to vector<8x128xf32>
    %376 = arith.truncf %374 : vector<8x32xf32> to vector<8x32xbf16>
    %cst_124 = arith.constant dense<0.000000e+00> : vector<8x128xf32>
    %377 = tpu.matmul %376, %298, %cst_124 {dimension_numbers = #tpu.dot_dimension_numbers<[1], [0], [0], [1], [0, 0, 1, 1], [], []>} : vector<8x32xbf16>, vector<32x128xbf16>, vector<8x128xf32> -> vector<8x128xf32>
    %378 = arith.addf %375, %377 : vector<8x128xf32>
    %379 = vector.extract_strided_slice %378 {offsets = [0, 0], sizes = [8, 32], strides = [1, 1]} : vector<8x128xf32> to vector<8x32xf32>
    %cst_125 = arith.constant 5.000000e-01 : f32
    %380 = vector.broadcast %cst_125 : f32 to vector<8x32xf32>
    %381 = arith.mulf %380, %379 : vector<8x32xf32>
    %382 = math.tanh %381 : vector<8x32xf32>
    %cst_126 = arith.constant 5.000000e-01 : f32
    %383 = vector.broadcast %cst_126 : f32 to vector<8x32xf32>
    %384 = arith.mulf %383, %382 : vector<8x32xf32>
    %cst_127 = arith.constant 5.000000e-01 : f32
    %385 = vector.broadcast %cst_127 : f32 to vector<8x32xf32>
    %386 = arith.addf %384, %385 : vector<8x32xf32>
    %387 = vector.extract_strided_slice %378 {offsets = [0, 32], sizes = [8, 32], strides = [1, 1]} : vector<8x128xf32> to vector<8x32xf32>
    %cst_128 = arith.constant 5.000000e-01 : f32
    %388 = vector.broadcast %cst_128 : f32 to vector<8x32xf32>
    %389 = arith.mulf %388, %387 : vector<8x32xf32>
    %390 = math.tanh %389 : vector<8x32xf32>
    %cst_129 = arith.constant 5.000000e-01 : f32
    %391 = vector.broadcast %cst_129 : f32 to vector<8x32xf32>
    %392 = arith.mulf %391, %390 : vector<8x32xf32>
    %cst_130 = arith.constant 5.000000e-01 : f32
    %393 = vector.broadcast %cst_130 : f32 to vector<8x32xf32>
    %394 = arith.addf %392, %393 : vector<8x32xf32>
    %395 = vector.extract_strided_slice %378 {offsets = [0, 64], sizes = [8, 32], strides = [1, 1]} : vector<8x128xf32> to vector<8x32xf32>
    %396 = math.tanh %395 : vector<8x32xf32>
    %397 = vector.extract_strided_slice %378 {offsets = [0, 96], sizes = [8, 32], strides = [1, 1]} : vector<8x128xf32> to vector<8x32xf32>
    %cst_131 = arith.constant 5.000000e-01 : f32
    %398 = vector.broadcast %cst_131 : f32 to vector<8x32xf32>
    %399 = arith.mulf %398, %397 : vector<8x32xf32>
    %400 = math.tanh %399 : vector<8x32xf32>
    %cst_132 = arith.constant 5.000000e-01 : f32
    %401 = vector.broadcast %cst_132 : f32 to vector<8x32xf32>
    %402 = arith.mulf %401, %400 : vector<8x32xf32>
    %cst_133 = arith.constant 5.000000e-01 : f32
    %403 = vector.broadcast %cst_133 : f32 to vector<8x32xf32>
    %404 = arith.addf %402, %403 : vector<8x32xf32>
    %405 = arith.mulf %394, %372 : vector<8x32xf32>
    %406 = arith.mulf %386, %396 : vector<8x32xf32>
    %407 = arith.addf %405, %406 : vector<8x32xf32>
    %408 = math.tanh %407 : vector<8x32xf32>
    %409 = arith.mulf %404, %408 : vector<8x32xf32>
    %410 = vector.extract_strided_slice %302 {offsets = [24, 0], sizes = [8, 128], strides = [1, 1]} : vector<64x128xf32> to vector<8x128xf32>
    %411 = arith.truncf %409 : vector<8x32xf32> to vector<8x32xbf16>
    %cst_134 = arith.constant dense<0.000000e+00> : vector<8x128xf32>
    %412 = tpu.matmul %411, %298, %cst_134 {dimension_numbers = #tpu.dot_dimension_numbers<[1], [0], [0], [1], [0, 0, 1, 1], [], []>} : vector<8x32xbf16>, vector<32x128xbf16>, vector<8x128xf32> -> vector<8x128xf32>
    %413 = arith.addf %410, %412 : vector<8x128xf32>
    %414 = vector.extract_strided_slice %413 {offsets = [0, 0], sizes = [8, 32], strides = [1, 1]} : vector<8x128xf32> to vector<8x32xf32>
    %cst_135 = arith.constant 5.000000e-01 : f32
    %415 = vector.broadcast %cst_135 : f32 to vector<8x32xf32>
    %416 = arith.mulf %415, %414 : vector<8x32xf32>
    %417 = math.tanh %416 : vector<8x32xf32>
    %cst_136 = arith.constant 5.000000e-01 : f32
    %418 = vector.broadcast %cst_136 : f32 to vector<8x32xf32>
    %419 = arith.mulf %418, %417 : vector<8x32xf32>
    %cst_137 = arith.constant 5.000000e-01 : f32
    %420 = vector.broadcast %cst_137 : f32 to vector<8x32xf32>
    %421 = arith.addf %419, %420 : vector<8x32xf32>
    %422 = vector.extract_strided_slice %413 {offsets = [0, 32], sizes = [8, 32], strides = [1, 1]} : vector<8x128xf32> to vector<8x32xf32>
    %cst_138 = arith.constant 5.000000e-01 : f32
    %423 = vector.broadcast %cst_138 : f32 to vector<8x32xf32>
    %424 = arith.mulf %423, %422 : vector<8x32xf32>
    %425 = math.tanh %424 : vector<8x32xf32>
    %cst_139 = arith.constant 5.000000e-01 : f32
    %426 = vector.broadcast %cst_139 : f32 to vector<8x32xf32>
    %427 = arith.mulf %426, %425 : vector<8x32xf32>
    %cst_140 = arith.constant 5.000000e-01 : f32
    %428 = vector.broadcast %cst_140 : f32 to vector<8x32xf32>
    %429 = arith.addf %427, %428 : vector<8x32xf32>
    %430 = vector.extract_strided_slice %413 {offsets = [0, 64], sizes = [8, 32], strides = [1, 1]} : vector<8x128xf32> to vector<8x32xf32>
    %431 = math.tanh %430 : vector<8x32xf32>
    %432 = vector.extract_strided_slice %413 {offsets = [0, 96], sizes = [8, 32], strides = [1, 1]} : vector<8x128xf32> to vector<8x32xf32>
    %cst_141 = arith.constant 5.000000e-01 : f32
    %433 = vector.broadcast %cst_141 : f32 to vector<8x32xf32>
    %434 = arith.mulf %433, %432 : vector<8x32xf32>
    %435 = math.tanh %434 : vector<8x32xf32>
    %cst_142 = arith.constant 5.000000e-01 : f32
    %436 = vector.broadcast %cst_142 : f32 to vector<8x32xf32>
    %437 = arith.mulf %436, %435 : vector<8x32xf32>
    %cst_143 = arith.constant 5.000000e-01 : f32
    %438 = vector.broadcast %cst_143 : f32 to vector<8x32xf32>
    %439 = arith.addf %437, %438 : vector<8x32xf32>
    %440 = arith.mulf %429, %407 : vector<8x32xf32>
    %441 = arith.mulf %421, %431 : vector<8x32xf32>
    %442 = arith.addf %440, %441 : vector<8x32xf32>
    %443 = math.tanh %442 : vector<8x32xf32>
    %444 = arith.mulf %439, %443 : vector<8x32xf32>
    %445 = vector.extract_strided_slice %302 {offsets = [32, 0], sizes = [8, 128], strides = [1, 1]} : vector<64x128xf32> to vector<8x128xf32>
    %446 = arith.truncf %444 : vector<8x32xf32> to vector<8x32xbf16>
    %cst_144 = arith.constant dense<0.000000e+00> : vector<8x128xf32>
    %447 = tpu.matmul %446, %298, %cst_144 {dimension_numbers = #tpu.dot_dimension_numbers<[1], [0], [0], [1], [0, 0, 1, 1], [], []>} : vector<8x32xbf16>, vector<32x128xbf16>, vector<8x128xf32> -> vector<8x128xf32>
    %448 = arith.addf %445, %447 : vector<8x128xf32>
    %449 = vector.extract_strided_slice %448 {offsets = [0, 0], sizes = [8, 32], strides = [1, 1]} : vector<8x128xf32> to vector<8x32xf32>
    %cst_145 = arith.constant 5.000000e-01 : f32
    %450 = vector.broadcast %cst_145 : f32 to vector<8x32xf32>
    %451 = arith.mulf %450, %449 : vector<8x32xf32>
    %452 = math.tanh %451 : vector<8x32xf32>
    %cst_146 = arith.constant 5.000000e-01 : f32
    %453 = vector.broadcast %cst_146 : f32 to vector<8x32xf32>
    %454 = arith.mulf %453, %452 : vector<8x32xf32>
    %cst_147 = arith.constant 5.000000e-01 : f32
    %455 = vector.broadcast %cst_147 : f32 to vector<8x32xf32>
    %456 = arith.addf %454, %455 : vector<8x32xf32>
    %457 = vector.extract_strided_slice %448 {offsets = [0, 32], sizes = [8, 32], strides = [1, 1]} : vector<8x128xf32> to vector<8x32xf32>
    %cst_148 = arith.constant 5.000000e-01 : f32
    %458 = vector.broadcast %cst_148 : f32 to vector<8x32xf32>
    %459 = arith.mulf %458, %457 : vector<8x32xf32>
    %460 = math.tanh %459 : vector<8x32xf32>
    %cst_149 = arith.constant 5.000000e-01 : f32
    %461 = vector.broadcast %cst_149 : f32 to vector<8x32xf32>
    %462 = arith.mulf %461, %460 : vector<8x32xf32>
    %cst_150 = arith.constant 5.000000e-01 : f32
    %463 = vector.broadcast %cst_150 : f32 to vector<8x32xf32>
    %464 = arith.addf %462, %463 : vector<8x32xf32>
    %465 = vector.extract_strided_slice %448 {offsets = [0, 64], sizes = [8, 32], strides = [1, 1]} : vector<8x128xf32> to vector<8x32xf32>
    %466 = math.tanh %465 : vector<8x32xf32>
    %467 = vector.extract_strided_slice %448 {offsets = [0, 96], sizes = [8, 32], strides = [1, 1]} : vector<8x128xf32> to vector<8x32xf32>
    %cst_151 = arith.constant 5.000000e-01 : f32
    %468 = vector.broadcast %cst_151 : f32 to vector<8x32xf32>
    %469 = arith.mulf %468, %467 : vector<8x32xf32>
    %470 = math.tanh %469 : vector<8x32xf32>
    %cst_152 = arith.constant 5.000000e-01 : f32
    %471 = vector.broadcast %cst_152 : f32 to vector<8x32xf32>
    %472 = arith.mulf %471, %470 : vector<8x32xf32>
    %cst_153 = arith.constant 5.000000e-01 : f32
    %473 = vector.broadcast %cst_153 : f32 to vector<8x32xf32>
    %474 = arith.addf %472, %473 : vector<8x32xf32>
    %475 = arith.mulf %464, %442 : vector<8x32xf32>
    %476 = arith.mulf %456, %466 : vector<8x32xf32>
    %477 = arith.addf %475, %476 : vector<8x32xf32>
    %478 = math.tanh %477 : vector<8x32xf32>
    %479 = arith.mulf %474, %478 : vector<8x32xf32>
    %480 = vector.extract_strided_slice %302 {offsets = [40, 0], sizes = [8, 128], strides = [1, 1]} : vector<64x128xf32> to vector<8x128xf32>
    %481 = arith.truncf %479 : vector<8x32xf32> to vector<8x32xbf16>
    %cst_154 = arith.constant dense<0.000000e+00> : vector<8x128xf32>
    %482 = tpu.matmul %481, %298, %cst_154 {dimension_numbers = #tpu.dot_dimension_numbers<[1], [0], [0], [1], [0, 0, 1, 1], [], []>} : vector<8x32xbf16>, vector<32x128xbf16>, vector<8x128xf32> -> vector<8x128xf32>
    %483 = arith.addf %480, %482 : vector<8x128xf32>
    %484 = vector.extract_strided_slice %483 {offsets = [0, 0], sizes = [8, 32], strides = [1, 1]} : vector<8x128xf32> to vector<8x32xf32>
    %cst_155 = arith.constant 5.000000e-01 : f32
    %485 = vector.broadcast %cst_155 : f32 to vector<8x32xf32>
    %486 = arith.mulf %485, %484 : vector<8x32xf32>
    %487 = math.tanh %486 : vector<8x32xf32>
    %cst_156 = arith.constant 5.000000e-01 : f32
    %488 = vector.broadcast %cst_156 : f32 to vector<8x32xf32>
    %489 = arith.mulf %488, %487 : vector<8x32xf32>
    %cst_157 = arith.constant 5.000000e-01 : f32
    %490 = vector.broadcast %cst_157 : f32 to vector<8x32xf32>
    %491 = arith.addf %489, %490 : vector<8x32xf32>
    %492 = vector.extract_strided_slice %483 {offsets = [0, 32], sizes = [8, 32], strides = [1, 1]} : vector<8x128xf32> to vector<8x32xf32>
    %cst_158 = arith.constant 5.000000e-01 : f32
    %493 = vector.broadcast %cst_158 : f32 to vector<8x32xf32>
    %494 = arith.mulf %493, %492 : vector<8x32xf32>
    %495 = math.tanh %494 : vector<8x32xf32>
    %cst_159 = arith.constant 5.000000e-01 : f32
    %496 = vector.broadcast %cst_159 : f32 to vector<8x32xf32>
    %497 = arith.mulf %496, %495 : vector<8x32xf32>
    %cst_160 = arith.constant 5.000000e-01 : f32
    %498 = vector.broadcast %cst_160 : f32 to vector<8x32xf32>
    %499 = arith.addf %497, %498 : vector<8x32xf32>
    %500 = vector.extract_strided_slice %483 {offsets = [0, 64], sizes = [8, 32], strides = [1, 1]} : vector<8x128xf32> to vector<8x32xf32>
    %501 = math.tanh %500 : vector<8x32xf32>
    %502 = vector.extract_strided_slice %483 {offsets = [0, 96], sizes = [8, 32], strides = [1, 1]} : vector<8x128xf32> to vector<8x32xf32>
    %cst_161 = arith.constant 5.000000e-01 : f32
    %503 = vector.broadcast %cst_161 : f32 to vector<8x32xf32>
    %504 = arith.mulf %503, %502 : vector<8x32xf32>
    %505 = math.tanh %504 : vector<8x32xf32>
    %cst_162 = arith.constant 5.000000e-01 : f32
    %506 = vector.broadcast %cst_162 : f32 to vector<8x32xf32>
    %507 = arith.mulf %506, %505 : vector<8x32xf32>
    %cst_163 = arith.constant 5.000000e-01 : f32
    %508 = vector.broadcast %cst_163 : f32 to vector<8x32xf32>
    %509 = arith.addf %507, %508 : vector<8x32xf32>
    %510 = arith.mulf %499, %477 : vector<8x32xf32>
    %511 = arith.mulf %491, %501 : vector<8x32xf32>
    %512 = arith.addf %510, %511 : vector<8x32xf32>
    %513 = math.tanh %512 : vector<8x32xf32>
    %514 = arith.mulf %509, %513 : vector<8x32xf32>
    %515 = vector.extract_strided_slice %302 {offsets = [48, 0], sizes = [8, 128], strides = [1, 1]} : vector<64x128xf32> to vector<8x128xf32>
    %516 = arith.truncf %514 : vector<8x32xf32> to vector<8x32xbf16>
    %cst_164 = arith.constant dense<0.000000e+00> : vector<8x128xf32>
    %517 = tpu.matmul %516, %298, %cst_164 {dimension_numbers = #tpu.dot_dimension_numbers<[1], [0], [0], [1], [0, 0, 1, 1], [], []>} : vector<8x32xbf16>, vector<32x128xbf16>, vector<8x128xf32> -> vector<8x128xf32>
    %518 = arith.addf %515, %517 : vector<8x128xf32>
    %519 = vector.extract_strided_slice %518 {offsets = [0, 0], sizes = [8, 32], strides = [1, 1]} : vector<8x128xf32> to vector<8x32xf32>
    %cst_165 = arith.constant 5.000000e-01 : f32
    %520 = vector.broadcast %cst_165 : f32 to vector<8x32xf32>
    %521 = arith.mulf %520, %519 : vector<8x32xf32>
    %522 = math.tanh %521 : vector<8x32xf32>
    %cst_166 = arith.constant 5.000000e-01 : f32
    %523 = vector.broadcast %cst_166 : f32 to vector<8x32xf32>
    %524 = arith.mulf %523, %522 : vector<8x32xf32>
    %cst_167 = arith.constant 5.000000e-01 : f32
    %525 = vector.broadcast %cst_167 : f32 to vector<8x32xf32>
    %526 = arith.addf %524, %525 : vector<8x32xf32>
    %527 = vector.extract_strided_slice %518 {offsets = [0, 32], sizes = [8, 32], strides = [1, 1]} : vector<8x128xf32> to vector<8x32xf32>
    %cst_168 = arith.constant 5.000000e-01 : f32
    %528 = vector.broadcast %cst_168 : f32 to vector<8x32xf32>
    %529 = arith.mulf %528, %527 : vector<8x32xf32>
    %530 = math.tanh %529 : vector<8x32xf32>
    %cst_169 = arith.constant 5.000000e-01 : f32
    %531 = vector.broadcast %cst_169 : f32 to vector<8x32xf32>
    %532 = arith.mulf %531, %530 : vector<8x32xf32>
    %cst_170 = arith.constant 5.000000e-01 : f32
    %533 = vector.broadcast %cst_170 : f32 to vector<8x32xf32>
    %534 = arith.addf %532, %533 : vector<8x32xf32>
    %535 = vector.extract_strided_slice %518 {offsets = [0, 64], sizes = [8, 32], strides = [1, 1]} : vector<8x128xf32> to vector<8x32xf32>
    %536 = math.tanh %535 : vector<8x32xf32>
    %537 = vector.extract_strided_slice %518 {offsets = [0, 96], sizes = [8, 32], strides = [1, 1]} : vector<8x128xf32> to vector<8x32xf32>
    %cst_171 = arith.constant 5.000000e-01 : f32
    %538 = vector.broadcast %cst_171 : f32 to vector<8x32xf32>
    %539 = arith.mulf %538, %537 : vector<8x32xf32>
    %540 = math.tanh %539 : vector<8x32xf32>
    %cst_172 = arith.constant 5.000000e-01 : f32
    %541 = vector.broadcast %cst_172 : f32 to vector<8x32xf32>
    %542 = arith.mulf %541, %540 : vector<8x32xf32>
    %cst_173 = arith.constant 5.000000e-01 : f32
    %543 = vector.broadcast %cst_173 : f32 to vector<8x32xf32>
    %544 = arith.addf %542, %543 : vector<8x32xf32>
    %545 = arith.mulf %534, %512 : vector<8x32xf32>
    %546 = arith.mulf %526, %536 : vector<8x32xf32>
    %547 = arith.addf %545, %546 : vector<8x32xf32>
    %548 = math.tanh %547 : vector<8x32xf32>
    %549 = arith.mulf %544, %548 : vector<8x32xf32>
    %550 = vector.extract_strided_slice %302 {offsets = [56, 0], sizes = [8, 128], strides = [1, 1]} : vector<64x128xf32> to vector<8x128xf32>
    %551 = arith.truncf %549 : vector<8x32xf32> to vector<8x32xbf16>
    %cst_174 = arith.constant dense<0.000000e+00> : vector<8x128xf32>
    %552 = tpu.matmul %551, %298, %cst_174 {dimension_numbers = #tpu.dot_dimension_numbers<[1], [0], [0], [1], [0, 0, 1, 1], [], []>} : vector<8x32xbf16>, vector<32x128xbf16>, vector<8x128xf32> -> vector<8x128xf32>
    %553 = arith.addf %550, %552 : vector<8x128xf32>
    %554 = vector.extract_strided_slice %553 {offsets = [0, 0], sizes = [8, 32], strides = [1, 1]} : vector<8x128xf32> to vector<8x32xf32>
    %cst_175 = arith.constant 5.000000e-01 : f32
    %555 = vector.broadcast %cst_175 : f32 to vector<8x32xf32>
    %556 = arith.mulf %555, %554 : vector<8x32xf32>
    %557 = math.tanh %556 : vector<8x32xf32>
    %cst_176 = arith.constant 5.000000e-01 : f32
    %558 = vector.broadcast %cst_176 : f32 to vector<8x32xf32>
    %559 = arith.mulf %558, %557 : vector<8x32xf32>
    %cst_177 = arith.constant 5.000000e-01 : f32
    %560 = vector.broadcast %cst_177 : f32 to vector<8x32xf32>
    %561 = arith.addf %559, %560 : vector<8x32xf32>
    %562 = vector.extract_strided_slice %553 {offsets = [0, 32], sizes = [8, 32], strides = [1, 1]} : vector<8x128xf32> to vector<8x32xf32>
    %cst_178 = arith.constant 5.000000e-01 : f32
    %563 = vector.broadcast %cst_178 : f32 to vector<8x32xf32>
    %564 = arith.mulf %563, %562 : vector<8x32xf32>
    %565 = math.tanh %564 : vector<8x32xf32>
    %cst_179 = arith.constant 5.000000e-01 : f32
    %566 = vector.broadcast %cst_179 : f32 to vector<8x32xf32>
    %567 = arith.mulf %566, %565 : vector<8x32xf32>
    %cst_180 = arith.constant 5.000000e-01 : f32
    %568 = vector.broadcast %cst_180 : f32 to vector<8x32xf32>
    %569 = arith.addf %567, %568 : vector<8x32xf32>
    %570 = vector.extract_strided_slice %553 {offsets = [0, 64], sizes = [8, 32], strides = [1, 1]} : vector<8x128xf32> to vector<8x32xf32>
    %571 = math.tanh %570 : vector<8x32xf32>
    %572 = vector.extract_strided_slice %553 {offsets = [0, 96], sizes = [8, 32], strides = [1, 1]} : vector<8x128xf32> to vector<8x32xf32>
    %cst_181 = arith.constant 5.000000e-01 : f32
    %573 = vector.broadcast %cst_181 : f32 to vector<8x32xf32>
    %574 = arith.mulf %573, %572 : vector<8x32xf32>
    %575 = math.tanh %574 : vector<8x32xf32>
    %cst_182 = arith.constant 5.000000e-01 : f32
    %576 = vector.broadcast %cst_182 : f32 to vector<8x32xf32>
    %577 = arith.mulf %576, %575 : vector<8x32xf32>
    %cst_183 = arith.constant 5.000000e-01 : f32
    %578 = vector.broadcast %cst_183 : f32 to vector<8x32xf32>
    %579 = arith.addf %577, %578 : vector<8x32xf32>
    %580 = arith.mulf %569, %547 : vector<8x32xf32>
    %581 = arith.mulf %561, %571 : vector<8x32xf32>
    %582 = arith.addf %580, %581 : vector<8x32xf32>
    %583 = math.tanh %582 : vector<8x32xf32>
    %584 = arith.mulf %579, %583 : vector<8x32xf32>
    %c1 = arith.constant 1 : index
    %c0_184 = arith.constant 0 : index
    %c0_185 = arith.constant 0 : index
    %585 = vector.load %arg8[%c1, %c0_184, %c0_185] : memref<2x8x32xf32, #tpu.memory_space<vmem>>, vector<1x8x32xf32>
    %586 = vector.shape_cast %585 : vector<1x8x32xf32> to vector<8x32xf32>
    %587 = vector.shape_cast %584 : vector<8x32xf32> to vector<1x8x32xf32>
    tpu.vector_store %arg8[%c1, %c0_184, %c0_185], %587 {strides = array<i32>} : memref<2x8x32xf32, #tpu.memory_space<vmem>>, vector<1x8x32xf32>,
    %c1_186 = arith.constant 1 : index
    %c0_187 = arith.constant 0 : index
    %c0_188 = arith.constant 0 : index
    %588 = vector.load %arg9[%c1_186, %c0_187, %c0_188] : memref<2x8x32xf32, #tpu.memory_space<vmem>>, vector<1x8x32xf32>
    %589 = vector.shape_cast %588 : vector<1x8x32xf32> to vector<8x32xf32>
    %590 = vector.shape_cast %582 : vector<8x32xf32> to vector<1x8x32xf32>
    tpu.vector_store %arg9[%c1_186, %c0_187, %c0_188], %590 {strides = array<i32>} : memref<2x8x32xf32, #tpu.memory_space<vmem>>, vector<1x8x32xf32>,
    return
  }
  func.func @transform_0(%arg0: i32) -> (i32, i32) {
    %c0_i32 = arith.constant 0 : i32
    %c0_i32_0 = arith.constant 0 : i32
    %c0_i32_1 = arith.constant 0 : i32
    return %c0_i32, %c0_i32_0 : i32, i32
  }
  func.func @transform_1(%arg0: i32) -> (i32, i32) {
    %c0_i32 = arith.constant 0 : i32
    %c0_i32_0 = arith.constant 0 : i32
    %c0_i32_1 = arith.constant 0 : i32
    return %c0_i32, %c0_i32_0 : i32, i32
  }
  func.func @transform_2(%arg0: i32) -> (i32, i32) {
    %c0_i32 = arith.constant 0 : i32
    %c0_i32_0 = arith.constant 0 : i32
    %c0_i32_1 = arith.constant 0 : i32
    return %c0_i32, %c0_i32_0 : i32, i32
  }
  func.func @transform_3(%arg0: i32) -> (i32, i32) {
    %c0_i32 = arith.constant 0 : i32
    %c0_i32_0 = arith.constant 0 : i32
    %c0_i32_1 = arith.constant 0 : i32
    return %c0_i32, %c0_i32_0 : i32, i32
  }
  func.func @transform_4(%arg0: i32) -> (i32, i32) {
    %c0_i32 = arith.constant 0 : i32
    %c0_i32_0 = arith.constant 0 : i32
    %c0_i32_1 = arith.constant 0 : i32
    return %c0_i32, %c0_i32_0 : i32, i32
  }
  func.func @transform_5(%arg0: i32) -> (i32, i32) {
    %c0_i32 = arith.constant 0 : i32
    %c0_i32_0 = arith.constant 0 : i32
    %c0_i32_1 = arith.constant 0 : i32
    return %c0_i32, %c0_i32_0 : i32, i32
  }
  func.func @transform_6(%arg0: i32) -> (i32, i32) {
    %c0_i32 = arith.constant 0 : i32
    %c0_i32_0 = arith.constant 0 : i32
    %c0_i32_1 = arith.constant 0 : i32
    return %c0_i32, %c0_i32_0 : i32, i32
  }
  func.func @transform_7(%arg0: i32) -> (i32, i32, i32) {
    %c0_i32 = arith.constant 0 : i32
    %c0_i32_0 = arith.constant 0 : i32
    %c0_i32_1 = arith.constant 0 : i32
    %c0_i32_2 = arith.constant 0 : i32
    return %c0_i32, %c0_i32_0, %c0_i32_1 : i32, i32, i32
  }
  func.func @transform_8(%arg0: i32) -> (i32, i32, i32) {
    %c0_i32 = arith.constant 0 : i32
    %c0_i32_0 = arith.constant 0 : i32
    %c0_i32_1 = arith.constant 0 : i32
    %c0_i32_2 = arith.constant 0 : i32
    return %c0_i32, %c0_i32_0, %c0_i32_1 : i32, i32, i32
  }
}

</mosaic_0001>

<llo_original>
// kernel: lstm_encoder_forward.1
$region0: #{lstm_encoder_forward.1}
  #allocation0 [shape = 'u32[]', space=smem, size = 0x4, offset = 0x4, fixed_abs, tag = 'smem constant byte address 0x4 - core index']
  #allocation1 [shape = 'u32[144,128]{1,0:T(1,128)}', space=vmem, size = 0x12000, scoped, tag = 'internal scratch']
  %s0 = inlined_call_operand.vmem [shape: bf16[64,16], index: 0, kind: input, shape index: {}]
  %s1 = inlined_call_operand.vmem [shape: bf16[16,128], index: 1, kind: input, shape index: {}]
  %s2 = inlined_call_operand.vmem [shape: bf16[32,128], index: 2, kind: input, shape index: {}]
  %s3 = inlined_call_operand.vmem [shape: f32[1,128], index: 3, kind: input, shape index: {}]
  %s4 = inlined_call_operand.vmem [shape: bf16[32,128], index: 4, kind: input, shape index: {}]
  %s5 = inlined_call_operand.vmem [shape: bf16[32,128], index: 5, kind: input, shape index: {}]
  %s6 = inlined_call_operand.vmem [shape: f32[1,128], index: 6, kind: input, shape index: {}]
  %s7 = inlined_call_operand.vmem [shape: f32[2,8,32], index: 7, kind: output, shape index: {0}]
  %s8 = inlined_call_operand.vmem [shape: f32[2,8,32], index: 8, kind: output, shape index: {1}]
  %9 = xla_tuple %s7, %s8
  %s10 = sld [smem:[#allocation0]]
  $region46: #{lstm_encoder_forward.1} parent=0
    _
  %s12 = ssub.s32 1, %s10
  %s13 = scalar_select 0, %s12, %s10
  // Predicated region
  $region2: #{lstm_encoder_forward.1} parent=0 // pred_check
    _
  $region3: #{lstm_encoder_forward.1} parent=0 // pred_check_branch
    %15 = sbr.rel (0) target = $region5
  $region4: #{lstm_encoder_forward.1} parent=0 // pred_region
    _
  $region5: #{lstm_encoder_forward.1} parent=0 // pred_fallthru
    _
  // Predicated region
  $region6: #{lstm_encoder_forward.1} parent=0 // pred_check
    _
  $region7: #{lstm_encoder_forward.1} parent=0 // pred_check_branch
    %17 = sbr.rel (0) target = $region9
  $region8: #{lstm_encoder_forward.1} parent=0 // pred_region
    _
  $region9: #{lstm_encoder_forward.1} parent=0 // pred_fallthru
    _
  // Predicated region
  $region10: #{lstm_encoder_forward.1} parent=0 // pred_check
    _
  $region11: #{lstm_encoder_forward.1} parent=0 // pred_check_branch
    %19 = sbr.rel (0) target = $region13
  $region12: #{lstm_encoder_forward.1} parent=0 // pred_region
    _
  $region13: #{lstm_encoder_forward.1} parent=0 // pred_fallthru
    _
  // Predicated region
  $region14: #{lstm_encoder_forward.1} parent=0 // pred_check
    _
  $region15: #{lstm_encoder_forward.1} parent=0 // pred_check_branch
    %21 = sbr.rel (0) target = $region17
  $region16: #{lstm_encoder_forward.1} parent=0 // pred_region
    _
  $region17: #{lstm_encoder_forward.1} parent=0 // pred_fallthru
    _
  // Predicated region
  $region18: #{lstm_encoder_forward.1} parent=0 // pred_check
    _
  $region19: #{lstm_encoder_forward.1} parent=0 // pred_check_branch
    %23 = sbr.rel (0) target = $region21
  $region20: #{lstm_encoder_forward.1} parent=0 // pred_region
    _
  $region21: #{lstm_encoder_forward.1} parent=0 // pred_fallthru
    _
  // Predicated region
  $region22: #{lstm_encoder_forward.1} parent=0 // pred_check
    _
  $region23: #{lstm_encoder_forward.1} parent=0 // pred_check_branch
    %25 = sbr.rel (0) target = $region25
  $region24: #{lstm_encoder_forward.1} parent=0 // pred_region
    _
  $region25: #{lstm_encoder_forward.1} parent=0 // pred_fallthru
    _
  // Predicated region
  $region26: #{lstm_encoder_forward.1} parent=0 // pred_check
    _
  $region27: #{lstm_encoder_forward.1} parent=0 // pred_check_branch
    %27 = sbr.rel (0) target = $region29
  $region28: #{lstm_encoder_forward.1} parent=0 // pred_region
    _
  $region29: #{lstm_encoder_forward.1} parent=0 // pred_fallthru
    _
  %v29 = vld [vmem:[%s0] sm:$0xf]
  %v30 = vld [vmem:[%s0 + $0x4] sm:$0xf]
  %v31 = vld [vmem:[%s0 + $0x8] sm:$0xf]
  %v32 = vld [vmem:[%s0 + $0xc] sm:$0xf]
  %v33 = vld [vmem:[%s0 + $0x10] sm:$0xf]
  %v34 = vld [vmem:[%s0 + $0x14] sm:$0xf]
  %v35 = vld [vmem:[%s0 + $0x18] sm:$0xf]
  %v36 = vld [vmem:[%s0 + $0x1c] sm:$0xf]
  %v37 = vld [vmem:[%s1] sm:$0xf]
  %v38 = vld [vmem:[%s1 + $0x4] sm:$0xf]
  %v39 = vld [vmem:[%s2] sm:$0xf]
  %v40 = vld [vmem:[%s2 + $0x4] sm:$0xf]
  %v41 = vld [vmem:[%s2 + $0x8] sm:$0xf]
  %v42 = vld [vmem:[%s2 + $0xc] sm:$0xf]
  %v43 = vld [vmem:[%s3] sm:$0x1]
  %v45 = vlaneseq
  %v46 = vshrl.u32 %v45, 7
  %v47 = vsub.s32 0, %v46
  %v48 = vrot.slane %v43, %v47
  %v58 = vunpack.c.l.b16 %v29
  %v59 = vunpack.c.l.b16 %v30
  %v60 = vunpack.c.l.b16 %v31
  %v61 = vunpack.c.l.b16 %v32
  %v62 = vunpack.c.l.b16 %v33
  %v63 = vunpack.c.l.b16 %v34
  %v64 = vunpack.c.l.b16 %v35
  %v65 = vunpack.c.l.b16 %v36
  %v66 = vpack.c.b16 %v59, %v58
  %v67 = vpack.c.b16 %v61, %v60
  %v68 = vpack.c.b16 %v63, %v62
  %v69 = vpack.c.b16 %v65, %v64
  %v72 = vunpack.c.l.b16 %v37
  %v73 = vunpack.c.l.b16 %v38
  %v74 = vpack.c.b16 %v73, %v72
  %vm76 = vcmask 130048
  %v78 = vsel %vm76, %v66, 0
  %v81 = vsel %vm76, %v67, 0
  %v84 = vsel %vm76, %v68, 0
  %v87 = vsel %vm76, %v69, 0
  %89 = vmatprep.subr.bf16.mxu0 0
  %90 = vmatpush1.bf16.msra.mxu0 %v74
  %91 = vmatprep.subr.bf16.mxu0 0
  %92 = vmatpush1.bf16.msra.mxu0 0
  %93 = vmatprep.subr.bf16.mxu0 0
  %94 = vmatpush1.bf16.msra.mxu0 0
  %95 = vmatprep.subr.bf16.mxu0 0
  %96 = vmatpush1.bf16.msra.mxu0 0
  %97 = vmatprep.subr.bf16.mxu0 0
  %98 = vmatpush1.bf16.msra.mxu0 0
  %99 = vmatprep.subr.bf16.mxu0 0
  %100 = vmatpush1.bf16.msra.mxu0 0
  %101 = vmatprep.subr.bf16.mxu0 0
  %102 = vmatpush1.bf16.msra.mxu0 0
  %103 = vmatprep.subr.bf16.mxu0 0
  %104 = vmatpush1.bf16.msra.mxu0 0
  %105 = vmatprep.subr.bf16.mxu0 0
  %106 = vmatpush1.bf16.msra.mxu0 0
  %107 = vmatprep.subr.bf16.mxu0 0
  %108 = vmatpush1.bf16.msra.mxu0 0
  %109 = vmatprep.subr.bf16.mxu0 0
  %110 = vmatpush1.bf16.msra.mxu0 0
  %111 = vmatprep.subr.bf16.mxu0 0
  %112 = vmatpush1.bf16.msra.mxu0 0
  %113 = vmatprep.subr.bf16.mxu0 0
  %114 = vmatpush1.bf16.msra.mxu0 0
  %115 = vmatprep.subr.bf16.mxu0 0
  %116 = vmatpush1.bf16.msra.mxu0 0
  %117 = vmatprep.subr.bf16.mxu0 0
  %118 = vmatpush1.bf16.msra.mxu0 0
  %119 = vmatprep.subr.bf16.mxu0 0
  %120 = vmatpush1.bf16.msra.mxu0 0
  %121 = vmatprep.mubr.bf16.mxu0 0
  %122 = vmatmul.mubr.bf16.gmra.mrb[0].mxu0 %v78
  %v123 = vpop.f32.mrb[0].mxu0
  %v124 = vadd.f32 %v48, %v123
  %v125 = vpop.f32.mrb[0].mxu0
  %v126 = vpop.f32.mrb[0].mxu0
  %v127 = vadd.f32 %v48, %v126
  %v128 = vpop.f32.mrb[0].mxu0
  %129 = vmatprep.mubr.bf16.mxu0 0
  %130 = vmatmul.mubr.bf16.gmra.mrb[0].mxu0 %v81
  %v131 = vpop.f32.mrb[0].mxu0
  %v132 = vadd.f32 %v48, %v131
  %v133 = vpop.f32.mrb[0].mxu0
  %v134 = vpop.f32.mrb[0].mxu0
  %v135 = vadd.f32 %v48, %v134
  %v136 = vpop.f32.mrb[0].mxu0
  %137 = vmatprep.mubr.bf16.mxu0 0
  %138 = vmatmul.mubr.bf16.gmra.mrb[0].mxu0 %v84
  %v139 = vpop.f32.mrb[0].mxu0
  %v140 = vadd.f32 %v48, %v139
  %v141 = vpop.f32.mrb[0].mxu0
  %v142 = vpop.f32.mrb[0].mxu0
  %v143 = vadd.f32 %v48, %v142
  %v144 = vpop.f32.mrb[0].mxu0
  %145 = vmatprep.mubr.bf16.mxu0 0
  %146 = vmatmul.mubr.bf16.gmra.mrb[0].mxu0 %v87
  %v147 = vpop.f32.mrb[0].mxu0
  %v148 = vadd.f32 %v48, %v147
  %v149 = vpop.f32.mrb[0].mxu0
  %v150 = vpop.f32.mrb[0].mxu0
  %v151 = vadd.f32 %v48, %v150
  %v152 = vpop.f32.mrb[0].mxu0
  %153 = vdwg.mxu0
  %v158 = vunpack.c.l.b16 %v39
  %v159 = vunpack.c.l.b16 %v40
  %v160 = vunpack.c.l.b16 %v41
  %v161 = vunpack.c.l.b16 %v42
  %v162 = vpack.c.b16 %v159, %v158
  %v163 = vpack.c.b16 %v161, %v160
  %vm166 = vcmask 261120
  %v168 = vsel %vm166, 0, 0
  %170 = vmatprep.subr.bf16.mxu0 0
  %171 = vmatpush1.bf16.msra.mxu0 %v162
  %172 = vmatprep.subr.bf16.mxu0 0
  %173 = vmatpush1.bf16.msra.mxu0 %v163
  %174 = vmatprep.subr.bf16.mxu0 0
  %175 = vmatpush1.bf16.msra.mxu0 0
  %176 = vmatprep.subr.bf16.mxu0 0
  %177 = vmatpush1.bf16.msra.mxu0 0
  %178 = vmatprep.subr.bf16.mxu0 0
  %179 = vmatpush1.bf16.msra.mxu0 0
  %180 = vmatprep.subr.bf16.mxu0 0
  %181 = vmatpush1.bf16.msra.mxu0 0
  %182 = vmatprep.subr.bf16.mxu0 0
  %183 = vmatpush1.bf16.msra.mxu0 0
  %184 = vmatprep.subr.bf16.mxu0 0
  %185 = vmatpush1.bf16.msra.mxu0 0
  %186 = vmatprep.subr.bf16.mxu0 0
  %187 = vmatpush1.bf16.msra.mxu0 0
  %188 = vmatprep.subr.bf16.mxu0 0
  %189 = vmatpush1.bf16.msra.mxu0 0
  %190 = vmatprep.subr.bf16.mxu0 0
  %191 = vmatpush1.bf16.msra.mxu0 0
  %192 = vmatprep.subr.bf16.mxu0 0
  %193 = vmatpush1.bf16.msra.mxu0 0
  %194 = vmatprep.subr.bf16.mxu0 0
  %195 = vmatpush1.bf16.msra.mxu0 0
  %196 = vmatprep.subr.bf16.mxu0 0
  %197 = vmatpush1.bf16.msra.mxu0 0
  %198 = vmatprep.subr.bf16.mxu0 0
  %199 = vmatpush1.bf16.msra.mxu0 0
  %200 = vmatprep.subr.bf16.mxu0 0
  %201 = vmatpush1.bf16.msra.mxu0 0
  %202 = vmatprep.mubr.bf16.mxu0 0
  %203 = vmatmul.mubr.bf16.gmra.mrb[0].mxu0 %v168
  %v204 = vpop.f32.mrb[0].mxu0
  %v205 = vadd.f32 0.0, %v204
  %v206 = vpop.f32.mrb[0].mxu0
  %v207 = vpop.f32.mrb[0].mxu0
  %v208 = vpop.f32.mrb[0].mxu0
  %209 = vdwg.mxu0
  %v210 = vadd.f32 %v124, %v205
  %v211 = vmul.f32 %v210, 0.5
  %v212 = vtanh.pop %v211
  %v213 = vmul.f32 %v212, 0.5
  %v214 = vadd.f32 %v213, 0.5
  %v215 = vtanh.pop %v210
  %v216 = vmul.f32 %v214, 0.0
  %218 = vrot.lane.b32.xlu0 %v215, 64
  %v219 = vpop.permute.xlu0 %218
  %v221 = vmul.f32 %v214, %v219
  %223 = vrot.lane.b32.xlu0 %v221, 32
  %v224 = vpop.permute.xlu0 %223
  %v226 = vadd.f32 %v216, %v224
  %v227 = vtanh.pop %v226
  %229 = vrot.lane.b32.xlu0 %v227, 64
  %v230 = vpop.permute.xlu0 %229
  %v232 = vmul.f32 %v214, %v230
  %v233 = vpack.c.bf16 %v232, %v232
  %235 = vrot.lane.b32.xlu0 %v233, 32
  %v236 = vpop.permute.xlu0 %235
  %v238 = vsel %vm166, %v236, 0
  %240 = vmatprep.subr.bf16.mxu0 0
  %241 = vmatpush1.bf16.msra.mxu0 %v162
  %242 = vmatprep.subr.bf16.mxu0 0
  %243 = vmatpush1.bf16.msra.mxu0 %v163
  %244 = vmatprep.subr.bf16.mxu0 0
  %245 = vmatpush1.bf16.msra.mxu0 0
  %246 = vmatprep.subr.bf16.mxu0 0
  %247 = vmatpush1.bf16.msra.mxu0 0
  %248 = vmatprep.subr.bf16.mxu0 0
  %249 = vmatpush1.bf16.msra.mxu0 0
  %250 = vmatprep.subr.bf16.mxu0 0
  %251 = vmatpush1.bf16.msra.mxu0 0
  %252 = vmatprep.subr.bf16.mxu0 0
  %253 = vmatpush1.bf16.msra.mxu0 0
  %254 = vmatprep.subr.bf16.mxu0 0
  %255 = vmatpush1.bf16.msra.mxu0 0
  %256 = vmatprep.subr.bf16.mxu0 0
  %257 = vmatpush1.bf16.msra.mxu0 0
  %258 = vmatprep.subr.bf16.mxu0 0
  %259 = vmatpush1.bf16.msra.mxu0 0
  %260 = vmatprep.subr.bf16.mxu0 0
  %261 = vmatpush1.bf16.msra.mxu0 0
  %262 = vmatprep.subr.bf16.mxu0 0
  %263 = vmatpush1.bf16.msra.mxu0 0
  %264 = vmatprep.subr.bf16.mxu0 0
  %265 = vmatpush1.bf16.msra.mxu0 0
  %266 = vmatprep.subr.bf16.mxu0 0
  %267 = vmatpush1.bf16.msra.mxu0 0
  %268 = vmatprep.subr.bf16.mxu0 0
  %269 = vmatpush1.bf16.msra.mxu0 0
  %270 = vmatprep.subr.bf16.mxu0 0
  %271 = vmatpush1.bf16.msra.mxu0 0
  %272 = vmatprep.mubr.bf16.mxu0 0
  %273 = vmatmul.mubr.bf16.gmra.mrb[0].mxu0 %v238
  %v274 = vpop.f32.mrb[0].mxu0
  %v275 = vadd.f32 0.0, %v274
  %v276 = vpop.f32.mrb[0].mxu0
  %v277 = vpop.f32.mrb[0].mxu0
  %v278 = vpop.f32.mrb[0].mxu0
  %279 = vdwg.mxu0
  %v280 = vadd.f32 %v127, %v275
  %v281 = vmul.f32 %v280, 0.5
  %v282 = vtanh.pop %v281
  %v283 = vmul.f32 %v282, 0.5
  %v284 = vadd.f32 %v283, 0.5
  %v285 = vtanh.pop %v280
  %v286 = vmul.f32 %v284, %v226
  %288 = vrot.lane.b32.xlu0 %v285, 64
  %v289 = vpop.permute.xlu0 %288
  %v291 = vmul.f32 %v284, %v289
  %293 = vrot.lane.b32.xlu0 %v291, 32
  %v294 = vpop.permute.xlu0 %293
  %v296 = vadd.f32 %v286, %v294
  %v297 = vtanh.pop %v296
  %299 = vrot.lane.b32.xlu0 %v297, 64
  %v300 = vpop.permute.xlu0 %299
  %v302 = vmul.f32 %v284, %v300
  %v303 = vpack.c.bf16 %v302, %v302
  %305 = vrot.lane.b32.xlu0 %v303, 32
  %v306 = vpop.permute.xlu0 %305
  %v308 = vsel %vm166, %v306, 0
  %310 = vmatprep.subr.bf16.mxu0 0
  %311 = vmatpush1.bf16.msra.mxu0 %v162
  %312 = vmatprep.subr.bf16.mxu0 0
  %313 = vmatpush1.bf16.msra.mxu0 %v163
  %314 = vmatprep.subr.bf16.mxu0 0
  %315 = vmatpush1.bf16.msra.mxu0 0
  %316 = vmatprep.subr.bf16.mxu0 0
  %317 = vmatpush1.bf16.msra.mxu0 0
  %318 = vmatprep.subr.bf16.mxu0 0
  %319 = vmatpush1.bf16.msra.mxu0 0
  %320 = vmatprep.subr.bf16.mxu0 0
  %321 = vmatpush1.bf16.msra.mxu0 0
  %322 = vmatprep.subr.bf16.mxu0 0
  %323 = vmatpush1.bf16.msra.mxu0 0
  %324 = vmatprep.subr.bf16.mxu0 0
  %325 = vmatpush1.bf16.msra.mxu0 0
  %326 = vmatprep.subr.bf16.mxu0 0
  %327 = vmatpush1.bf16.msra.mxu0 0
  %328 = vmatprep.subr.bf16.mxu0 0
  %329 = vmatpush1.bf16.msra.mxu0 0
  %330 = vmatprep.subr.bf16.mxu0 0
  %331 = vmatpush1.bf16.msra.mxu0 0
  %332 = vmatprep.subr.bf16.mxu0 0
  %333 = vmatpush1.bf16.msra.mxu0 0
  %334 = vmatprep.subr.bf16.mxu0 0
  %335 = vmatpush1.bf16.msra.mxu0 0
  %336 = vmatprep.subr.bf16.mxu0 0
  %337 = vmatpush1.bf16.msra.mxu0 0
  %338 = vmatprep.subr.bf16.mxu0 0
  %339 = vmatpush1.bf16.msra.mxu0 0
  %340 = vmatprep.subr.bf16.mxu0 0
  %341 = vmatpush1.bf16.msra.mxu0 0
  %342 = vmatprep.mubr.bf16.mxu0 0
  %343 = vmatmul.mubr.bf16.gmra.mrb[0].mxu0 %v308
  %v344 = vpop.f32.mrb[0].mxu0
  %v345 = vadd.f32 0.0, %v344
  %v346 = vpop.f32.mrb[0].mxu0
  %v347 = vpop.f32.mrb[0].mxu0
  %v348 = vpop.f32.mrb[0].mxu0
  %349 = vdwg.mxu0
  %v350 = vadd.f32 %v132, %v345
  %v351 = vmul.f32 %v350, 0.5
  %v352 = vtanh.pop %v351
  %v353 = vmul.f32 %v352, 0.5
  %v354 = vadd.f32 %v353, 0.5
  %v355 = vtanh.pop %v350
  %v356 = vmul.f32 %v354, %v296
  %358 = vrot.lane.b32.xlu0 %v355, 64
  %v359 = vpop.permute.xlu0 %358
  %v361 = vmul.f32 %v354, %v359
  %363 = vrot.lane.b32.xlu0 %v361, 32
  %v364 = vpop.permute.xlu0 %363
  %v366 = vadd.f32 %v356, %v364
  %v367 = vtanh.pop %v366
  %369 = vrot.lane.b32.xlu0 %v367, 64
  %v370 = vpop.permute.xlu0 %369
  %v372 = vmul.f32 %v354, %v370
  %v373 = vpack.c.bf16 %v372, %v372
  %375 = vrot.lane.b32.xlu0 %v373, 32
  %v376 = vpop.permute.xlu0 %375
  %v378 = vsel %vm166, %v376, 0
  %380 = vmatprep.subr.bf16.mxu0 0
  %381 = vmatpush1.bf16.msra.mxu0 %v162
  %382 = vmatprep.subr.bf16.mxu0 0
  %383 = vmatpush1.bf16.msra.mxu0 %v163
  %384 = vmatprep.subr.bf16.mxu0 0
  %385 = vmatpush1.bf16.msra.mxu0 0
  %386 = vmatprep.subr.bf16.mxu0 0
  %387 = vmatpush1.bf16.msra.mxu0 0
  %388 = vmatprep.subr.bf16.mxu0 0
  %389 = vmatpush1.bf16.msra.mxu0 0
  %390 = vmatprep.subr.bf16.mxu0 0
  %391 = vmatpush1.bf16.msra.mxu0 0
  %392 = vmatprep.subr.bf16.mxu0 0
  %393 = vmatpush1.bf16.msra.mxu0 0
  %394 = vmatprep.subr.bf16.mxu0 0
  %395 = vmatpush1.bf16.msra.mxu0 0
  %396 = vmatprep.subr.bf16.mxu0 0
  %397 = vmatpush1.bf16.msra.mxu0 0
  %398 = vmatprep.subr.bf16.mxu0 0
  %399 = vmatpush1.bf16.msra.mxu0 0
  %400 = vmatprep.subr.bf16.mxu0 0
  %401 = vmatpush1.bf16.msra.mxu0 0
  %402 = vmatprep.subr.bf16.mxu0 0
  %403 = vmatpush1.bf16.msra.mxu0 0
  %404 = vmatprep.subr.bf16.mxu0 0
  %405 = vmatpush1.bf16.msra.mxu0 0
  %406 = vmatprep.subr.bf16.mxu0 0
  %407 = vmatpush1.bf16.msra.mxu0 0
  %408 = vmatprep.subr.bf16.mxu0 0
  %409 = vmatpush1.bf16.msra.mxu0 0
  %410 = vmatprep.subr.bf16.mxu0 0
  %411 = vmatpush1.bf16.msra.mxu0 0
  %412 = vmatprep.mubr.bf16.mxu0 0
  %413 = vmatmul.mubr.bf16.gmra.mrb[0].mxu0 %v378
  %v414 = vpop.f32.mrb[0].mxu0
  %v415 = vadd.f32 0.0, %v414
  %v416 = vpop.f32.mrb[0].mxu0
  %v417 = vpop.f32.mrb[0].mxu0
  %v418 = vpop.f32.mrb[0].mxu0
  %419 = vdwg.mxu0
  %v420 = vadd.f32 %v135, %v415
  %v421 = vmul.f32 %v420, 0.5
  %v422 = vtanh.pop %v421
  %v423 = vmul.f32 %v422, 0.5
  %v424 = vadd.f32 %v423, 0.5
  %v425 = vtanh.pop %v420
  %v426 = vmul.f32 %v424, %v366
  %428 = vrot.lane.b32.xlu0 %v425, 64
  %v429 = vpop.permute.xlu0 %428
  %v431 = vmul.f32 %v424, %v429
  %433 = vrot.lane.b32.xlu0 %v431, 32
  %v434 = vpop.permute.xlu0 %433
  %v436 = vadd.f32 %v426, %v434
  %v437 = vtanh.pop %v436
  %439 = vrot.lane.b32.xlu0 %v437, 64
  %v440 = vpop.permute.xlu0 %439
  %v442 = vmul.f32 %v424, %v440
  %v443 = vpack.c.bf16 %v442, %v442
  %445 = vrot.lane.b32.xlu0 %v443, 32
  %v446 = vpop.permute.xlu0 %445
  %v448 = vsel %vm166, %v446, 0
  %450 = vmatprep.subr.bf16.mxu0 0
  %451 = vmatpush1.bf16.msra.mxu0 %v162
  %452 = vmatprep.subr.bf16.mxu0 0
  %453 = vmatpush1.bf16.msra.mxu0 %v163
  %454 = vmatprep.subr.bf16.mxu0 0
  %455 = vmatpush1.bf16.msra.mxu0 0
  %456 = vmatprep.subr.bf16.mxu0 0
  %457 = vmatpush1.bf16.msra.mxu0 0
  %458 = vmatprep.subr.bf16.mxu0 0
  %459 = vmatpush1.bf16.msra.mxu0 0
  %460 = vmatprep.subr.bf16.mxu0 0
  %461 = vmatpush1.bf16.msra.mxu0 0
  %462 = vmatprep.subr.bf16.mxu0 0
  %463 = vmatpush1.bf16.msra.mxu0 0
  %464 = vmatprep.subr.bf16.mxu0 0
  %465 = vmatpush1.bf16.msra.mxu0 0
  %466 = vmatprep.subr.bf16.mxu0 0
  %467 = vmatpush1.bf16.msra.mxu0 0
  %468 = vmatprep.subr.bf16.mxu0 0
  %469 = vmatpush1.bf16.msra.mxu0 0
  %470 = vmatprep.subr.bf16.mxu0 0
  %471 = vmatpush1.bf16.msra.mxu0 0
  %472 = vmatprep.subr.bf16.mxu0 0
  %473 = vmatpush1.bf16.msra.mxu0 0
  %474 = vmatprep.subr.bf16.mxu0 0
  %475 = vmatpush1.bf16.msra.mxu0 0
  %476 = vmatprep.subr.bf16.mxu0 0
  %477 = vmatpush1.bf16.msra.mxu0 0
  %478 = vmatprep.subr.bf16.mxu0 0
  %479 = vmatpush1.bf16.msra.mxu0 0
  %480 = vmatprep.subr.bf16.mxu0 0
  %481 = vmatpush1.bf16.msra.mxu0 0
  %482 = vmatprep.mubr.bf16.mxu0 0
  %483 = vmatmul.mubr.bf16.gmra.mrb[0].mxu0 %v448
  %v484 = vpop.f32.mrb[0].mxu0
  %v485 = vadd.f32 0.0, %v484
  %v486 = vpop.f32.mrb[0].mxu0
  %v487 = vpop.f32.mrb[0].mxu0
  %v488 = vpop.f32.mrb[0].mxu0
  %489 = vdwg.mxu0
  %v490 = vadd.f32 %v140, %v485
  %v491 = vmul.f32 %v490, 0.5
  %v492 = vtanh.pop %v491
  %v493 = vmul.f32 %v492, 0.5
  %v494 = vadd.f32 %v493, 0.5
  %v495 = vtanh.pop %v490
  %v496 = vmul.f32 %v494, %v436
  %498 = vrot.lane.b32.xlu0 %v495, 64
  %v499 = vpop.permute.xlu0 %498
  %v501 = vmul.f32 %v494, %v499
  %503 = vrot.lane.b32.xlu0 %v501, 32
  %v504 = vpop.permute.xlu0 %503
  %v506 = vadd.f32 %v496, %v504
  %v507 = vtanh.pop %v506
  %509 = vrot.lane.b32.xlu0 %v507, 64
  %v510 = vpop.permute.xlu0 %509
  %v512 = vmul.f32 %v494, %v510
  %v513 = vpack.c.bf16 %v512, %v512
  %515 = vrot.lane.b32.xlu0 %v513, 32
  %v516 = vpop.permute.xlu0 %515
  %v518 = vsel %vm166, %v516, 0
  %520 = vmatprep.subr.bf16.mxu0 0
  %521 = vmatpush1.bf16.msra.mxu0 %v162
  %522 = vmatprep.subr.bf16.mxu0 0
  %523 = vmatpush1.bf16.msra.mxu0 %v163
  %524 = vmatprep.subr.bf16.mxu0 0
  %525 = vmatpush1.bf16.msra.mxu0 0
  %526 = vmatprep.subr.bf16.mxu0 0
  %527 = vmatpush1.bf16.msra.mxu0 0
  %528 = vmatprep.subr.bf16.mxu0 0
  %529 = vmatpush1.bf16.msra.mxu0 0
  %530 = vmatprep.subr.bf16.mxu0 0
  %531 = vmatpush1.bf16.msra.mxu0 0
  %532 = vmatprep.subr.bf16.mxu0 0
  %533 = vmatpush1.bf16.msra.mxu0 0
  %534 = vmatprep.subr.bf16.mxu0 0
  %535 = vmatpush1.bf16.msra.mxu0 0
  %536 = vmatprep.subr.bf16.mxu0 0
  %537 = vmatpush1.bf16.msra.mxu0 0
  %538 = vmatprep.subr.bf16.mxu0 0
  %539 = vmatpush1.bf16.msra.mxu0 0
  %540 = vmatprep.subr.bf16.mxu0 0
  %541 = vmatpush1.bf16.msra.mxu0 0
  %542 = vmatprep.subr.bf16.mxu0 0
  %543 = vmatpush1.bf16.msra.mxu0 0
  %544 = vmatprep.subr.bf16.mxu0 0
  %545 = vmatpush1.bf16.msra.mxu0 0
  %546 = vmatprep.subr.bf16.mxu0 0
  %547 = vmatpush1.bf16.msra.mxu0 0
  %548 = vmatprep.subr.bf16.mxu0 0
  %549 = vmatpush1.bf16.msra.mxu0 0
  %550 = vmatprep.subr.bf16.mxu0 0
  %551 = vmatpush1.bf16.msra.mxu0 0
  %552 = vmatprep.mubr.bf16.mxu0 0
  %553 = vmatmul.mubr.bf16.gmra.mrb[0].mxu0 %v518
  %v554 = vpop.f32.mrb[0].mxu0
  %v555 = vadd.f32 0.0, %v554
  %v556 = vpop.f32.mrb[0].mxu0
  %v557 = vpop.f32.mrb[0].mxu0
  %v558 = vpop.f32.mrb[0].mxu0
  %559 = vdwg.mxu0
  %v560 = vadd.f32 %v143, %v555
  %v561 = vmul.f32 %v560, 0.5
  %v562 = vtanh.pop %v561
  %v563 = vmul.f32 %v562, 0.5
  %v564 = vadd.f32 %v563, 0.5
  %v565 = vtanh.pop %v560
  %v566 = vmul.f32 %v564, %v506
  %568 = vrot.lane.b32.xlu0 %v565, 64
  %v569 = vpop.permute.xlu0 %568
  %v571 = vmul.f32 %v564, %v569
  %573 = vrot.lane.b32.xlu0 %v571, 32
  %v574 = vpop.permute.xlu0 %573
  %v576 = vadd.f32 %v566, %v574
  %v577 = vtanh.pop %v576
  %579 = vrot.lane.b32.xlu0 %v577, 64
  %v580 = vpop.permute.xlu0 %579
  %v582 = vmul.f32 %v564, %v580
  %v583 = vpack.c.bf16 %v582, %v582
  %585 = vrot.lane.b32.xlu0 %v583, 32
  %v586 = vpop.permute.xlu0 %585
  %v588 = vsel %vm166, %v586, 0
  %590 = vmatprep.subr.bf16.mxu0 0
  %591 = vmatpush1.bf16.msra.mxu0 %v162
  %592 = vmatprep.subr.bf16.mxu0 0
  %593 = vmatpush1.bf16.msra.mxu0 %v163
  %594 = vmatprep.subr.bf16.mxu0 0
  %595 = vmatpush1.bf16.msra.mxu0 0
  %596 = vmatprep.subr.bf16.mxu0 0
  %597 = vmatpush1.bf16.msra.mxu0 0
  %598 = vmatprep.subr.bf16.mxu0 0
  %599 = vmatpush1.bf16.msra.mxu0 0
  %600 = vmatprep.subr.bf16.mxu0 0
  %601 = vmatpush1.bf16.msra.mxu0 0
  %602 = vmatprep.subr.bf16.mxu0 0
  %603 = vmatpush1.bf16.msra.mxu0 0
  %604 = vmatprep.subr.bf16.mxu0 0
  %605 = vmatpush1.bf16.msra.mxu0 0
  %606 = vmatprep.subr.bf16.mxu0 0
  %607 = vmatpush1.bf16.msra.mxu0 0
  %608 = vmatprep.subr.bf16.mxu0 0
  %609 = vmatpush1.bf16.msra.mxu0 0
  %610 = vmatprep.subr.bf16.mxu0 0
  %611 = vmatpush1.bf16.msra.mxu0 0
  %612 = vmatprep.subr.bf16.mxu0 0
  %613 = vmatpush1.bf16.msra.mxu0 0
  %614 = vmatprep.subr.bf16.mxu0 0
  %615 = vmatpush1.bf16.msra.mxu0 0
  %616 = vmatprep.subr.bf16.mxu0 0
  %617 = vmatpush1.bf16.msra.mxu0 0
  %618 = vmatprep.subr.bf16.mxu0 0
  %619 = vmatpush1.bf16.msra.mxu0 0
  %620 = vmatprep.subr.bf16.mxu0 0
  %621 = vmatpush1.bf16.msra.mxu0 0
  %622 = vmatprep.mubr.bf16.mxu0 0
  %623 = vmatmul.mubr.bf16.gmra.mrb[0].mxu0 %v588
  %v624 = vpop.f32.mrb[0].mxu0
  %v625 = vadd.f32 0.0, %v624
  %v626 = vpop.f32.mrb[0].mxu0
  %v627 = vpop.f32.mrb[0].mxu0
  %v628 = vpop.f32.mrb[0].mxu0
  %629 = vdwg.mxu0
  %v630 = vadd.f32 %v148, %v625
  %v631 = vmul.f32 %v630, 0.5
  %v632 = vtanh.pop %v631
  %v633 = vmul.f32 %v632, 0.5
  %v634 = vadd.f32 %v633, 0.5
  %v635 = vtanh.pop %v630
  %v636 = vmul.f32 %v634, %v576
  %638 = vrot.lane.b32.xlu0 %v635, 64
  %v639 = vpop.permute.xlu0 %638
  %v641 = vmul.f32 %v634, %v639
  %643 = vrot.lane.b32.xlu0 %v641, 32
  %v644 = vpop.permute.xlu0 %643
  %v646 = vadd.f32 %v636, %v644
  %v647 = vtanh.pop %v646
  %649 = vrot.lane.b32.xlu0 %v647, 64
  %v650 = vpop.permute.xlu0 %649
  %v652 = vmul.f32 %v634, %v650
  %v653 = vpack.c.bf16 %v652, %v652
  %655 = vrot.lane.b32.xlu0 %v653, 32
  %v656 = vpop.permute.xlu0 %655
  %v658 = vsel %vm166, %v656, 0
  %660 = vmatprep.subr.bf16.mxu0 0
  %661 = vmatpush1.bf16.msra.mxu0 %v162
  %662 = vmatprep.subr.bf16.mxu0 0
  %663 = vmatpush1.bf16.msra.mxu0 %v163
  %664 = vmatprep.subr.bf16.mxu0 0
  %665 = vmatpush1.bf16.msra.mxu0 0
  %666 = vmatprep.subr.bf16.mxu0 0
  %667 = vmatpush1.bf16.msra.mxu0 0
  %668 = vmatprep.subr.bf16.mxu0 0
  %669 = vmatpush1.bf16.msra.mxu0 0
  %670 = vmatprep.subr.bf16.mxu0 0
  %671 = vmatpush1.bf16.msra.mxu0 0
  %672 = vmatprep.subr.bf16.mxu0 0
  %673 = vmatpush1.bf16.msra.mxu0 0
  %674 = vmatprep.subr.bf16.mxu0 0
  %675 = vmatpush1.bf16.msra.mxu0 0
  %676 = vmatprep.subr.bf16.mxu0 0
  %677 = vmatpush1.bf16.msra.mxu0 0
  %678 = vmatprep.subr.bf16.mxu0 0
  %679 = vmatpush1.bf16.msra.mxu0 0
  %680 = vmatprep.subr.bf16.mxu0 0
  %681 = vmatpush1.bf16.msra.mxu0 0
  %682 = vmatprep.subr.bf16.mxu0 0
  %683 = vmatpush1.bf16.msra.mxu0 0
  %684 = vmatprep.subr.bf16.mxu0 0
  %685 = vmatpush1.bf16.msra.mxu0 0
  %686 = vmatprep.subr.bf16.mxu0 0
  %687 = vmatpush1.bf16.msra.mxu0 0
  %688 = vmatprep.subr.bf16.mxu0 0
  %689 = vmatpush1.bf16.msra.mxu0 0
  %690 = vmatprep.subr.bf16.mxu0 0
  %691 = vmatpush1.bf16.msra.mxu0 0
  %692 = vmatprep.mubr.bf16.mxu0 0
  %693 = vmatmul.mubr.bf16.gmra.mrb[0].mxu0 %v658
  %v694 = vpop.f32.mrb[0].mxu0
  %v695 = vadd.f32 0.0, %v694
  %v696 = vpop.f32.mrb[0].mxu0
  %v697 = vpop.f32.mrb[0].mxu0
  %v698 = vpop.f32.mrb[0].mxu0
  %699 = vdwg.mxu0
  %v700 = vadd.f32 %v151, %v695
  %v701 = vmul.f32 %v700, 0.5
  %v702 = vtanh.pop %v701
  %v703 = vmul.f32 %v702, 0.5
  %v704 = vadd.f32 %v703, 0.5
  %v705 = vtanh.pop %v700
  %v706 = vmul.f32 %v704, %v646
  %708 = vrot.lane.b32.xlu0 %v705, 64
  %v709 = vpop.permute.xlu0 %708
  %v711 = vmul.f32 %v704, %v709
  %713 = vrot.lane.b32.xlu0 %v711, 32
  %v714 = vpop.permute.xlu0 %713
  %v716 = vadd.f32 %v706, %v714
  %v717 = vtanh.pop %v716
  %719 = vrot.lane.b32.xlu0 %v717, 64
  %v720 = vpop.permute.xlu0 %719
  %v722 = vmul.f32 %v704, %v720
  %v723 = vpack.c.bf16 %v302, %v232
  %v724 = vpack.c.bf16 %v442, %v372
  %v725 = vpack.c.bf16 %v582, %v512
  %v726 = vpack.c.bf16 %v722, %v652
  %728 = vrot.lane.b32.xlu0 %v722, 32
  %v729 = vpop.permute.xlu0 %728
  %731 = vst.msk [vmem:[%s7] sm:$0xff] %vm166, %v729
  %733 = vrot.lane.b32.xlu0 %v716, 96
  %v734 = vpop.permute.xlu0 %733
  %736 = vst.msk [vmem:[%s8] sm:$0xff] %vm166, %v734
  %v737 = vld [vmem:[%s4] sm:$0xf]
  %v738 = vld [vmem:[%s4 + $0x4] sm:$0xf]
  %v739 = vld [vmem:[%s4 + $0x8] sm:$0xf]
  %v740 = vld [vmem:[%s4 + $0xc] sm:$0xf]
  %v741 = vld [vmem:[%s5] sm:$0xf]
  %v742 = vld [vmem:[%s5 + $0x4] sm:$0xf]
  %v743 = vld [vmem:[%s5 + $0x8] sm:$0xf]
  %v744 = vld [vmem:[%s5 + $0xc] sm:$0xf]
  %v745 = vld [vmem:[%s6] sm:$0x1]
  %v747 = vlaneseq
  %v748 = vshrl.u32 %v747, 7
  %v749 = vsub.s32 0, %v748
  %v750 = vrot.slane %v745, %v749
  %756 = vrot.lane.b32.xlu0 %v723, 32
  %v757 = vpop.permute.xlu0 %756
  %758 = vrot.lane.b32.xlu0 %v724, 32
  %v759 = vpop.permute.xlu0 %758
  %760 = vrot.lane.b32.xlu0 %v725, 32
  %v761 = vpop.permute.xlu0 %760
  %762 = vrot.lane.b32.xlu0 %v726, 32
  %v763 = vpop.permute.xlu0 %762
  %v768 = vunpack.c.l.b16 %v737
  %v769 = vunpack.c.l.b16 %v738
  %v770 = vunpack.c.l.b16 %v739
  %v771 = vunpack.c.l.b16 %v740
  %v772 = vpack.c.b16 %v769, %v768
  %v773 = vpack.c.b16 %v771, %v770
  %v777 = vsel %vm166, %v757, 0
  %v780 = vsel %vm166, %v759, 0
  %v783 = vsel %vm166, %v761, 0
  %v786 = vsel %vm166, %v763, 0
  %788 = vmatprep.subr.bf16.mxu0 0
  %789 = vmatpush1.bf16.msra.mxu0 %v772
  %790 = vmatprep.subr.bf16.mxu0 0
  %791 = vmatpush1.bf16.msra.mxu0 %v773
  %792 = vmatprep.subr.bf16.mxu0 0
  %793 = vmatpush1.bf16.msra.mxu0 0
  %794 = vmatprep.subr.bf16.mxu0 0
  %795 = vmatpush1.bf16.msra.mxu0 0
  %796 = vmatprep.subr.bf16.mxu0 0
  %797 = vmatpush1.bf16.msra.mxu0 0
  %798 = vmatprep.subr.bf16.mxu0 0
  %799 = vmatpush1.bf16.msra.mxu0 0
  %800 = vmatprep.subr.bf16.mxu0 0
  %801 = vmatpush1.bf16.msra.mxu0 0
  %802 = vmatprep.subr.bf16.mxu0 0
  %803 = vmatpush1.bf16.msra.mxu0 0
  %804 = vmatprep.subr.bf16.mxu0 0
  %805 = vmatpush1.bf16.msra.mxu0 0
  %806 = vmatprep.subr.bf16.mxu0 0
  %807 = vmatpush1.bf16.msra.mxu0 0
  %808 = vmatprep.subr.bf16.mxu0 0
  %809 = vmatpush1.bf16.msra.mxu0 0
  %810 = vmatprep.subr.bf16.mxu0 0
  %811 = vmatpush1.bf16.msra.mxu0 0
  %812 = vmatprep.subr.bf16.mxu0 0
  %813 = vmatpush1.bf16.msra.mxu0 0
  %814 = vmatprep.subr.bf16.mxu0 0
  %815 = vmatpush1.bf16.msra.mxu0 0
  %816 = vmatprep.subr.bf16.mxu0 0
  %817 = vmatpush1.bf16.msra.mxu0 0
  %818 = vmatprep.subr.bf16.mxu0 0
  %819 = vmatpush1.bf16.msra.mxu0 0
  %820 = vmatprep.mubr.bf16.mxu0 0
  %821 = vmatmul.mubr.bf16.gmra.mrb[0].mxu0 %v777
  %v822 = vpop.f32.mrb[0].mxu0
  %v823 = vadd.f32 %v750, %v822
  %v824 = vpop.f32.mrb[0].mxu0
  %v825 = vpop.f32.mrb[0].mxu0
  %v826 = vadd.f32 %v750, %v825
  %v827 = vpop.f32.mrb[0].mxu0
  %828 = vmatprep.mubr.bf16.mxu0 0
  %829 = vmatmul.mubr.bf16.gmra.mrb[0].mxu0 %v780
  %v830 = vpop.f32.mrb[0].mxu0
  %v831 = vadd.f32 %v750, %v830
  %v832 = vpop.f32.mrb[0].mxu0
  %v833 = vpop.f32.mrb[0].mxu0
  %v834 = vadd.f32 %v750, %v833
  %v835 = vpop.f32.mrb[0].mxu0
  %836 = vmatprep.mubr.bf16.mxu0 0
  %837 = vmatmul.mubr.bf16.gmra.mrb[0].mxu0 %v783
  %v838 = vpop.f32.mrb[0].mxu0
  %v839 = vadd.f32 %v750, %v838
  %v840 = vpop.f32.mrb[0].mxu0
  %v841 = vpop.f32.mrb[0].mxu0
  %v842 = vadd.f32 %v750, %v841
  %v843 = vpop.f32.mrb[0].mxu0
  %844 = vmatprep.mubr.bf16.mxu0 0
  %845 = vmatmul.mubr.bf16.gmra.mrb[0].mxu0 %v786
  %v846 = vpop.f32.mrb[0].mxu0
  %v847 = vadd.f32 %v750, %v846
  %v848 = vpop.f32.mrb[0].mxu0
  %v849 = vpop.f32.mrb[0].mxu0
  %v850 = vadd.f32 %v750, %v849
  %v851 = vpop.f32.mrb[0].mxu0
  %852 = vdwg.mxu0
  %v857 = vunpack.c.l.b16 %v741
  %v858 = vunpack.c.l.b16 %v742
  %v859 = vunpack.c.l.b16 %v743
  %v860 = vunpack.c.l.b16 %v744
  %v861 = vpack.c.b16 %v858, %v857
  %v862 = vpack.c.b16 %v860, %v859
  %865 = vmatprep.subr.bf16.mxu0 0
  %866 = vmatpush1.bf16.msra.mxu0 %v861
  %867 = vmatprep.subr.bf16.mxu0 0
  %868 = vmatpush1.bf16.msra.mxu0 %v862
  %869 = vmatprep.subr.bf16.mxu0 0
  %870 = vmatpush1.bf16.msra.mxu0 0
  %871 = vmatprep.subr.bf16.mxu0 0
  %872 = vmatpush1.bf16.msra.mxu0 0
  %873 = vmatprep.subr.bf16.mxu0 0
  %874 = vmatpush1.bf16.msra.mxu0 0
  %875 = vmatprep.subr.bf16.mxu0 0
  %876 = vmatpush1.bf16.msra.mxu0 0
  %877 = vmatprep.subr.bf16.mxu0 0
  %878 = vmatpush1.bf16.msra.mxu0 0
  %879 = vmatprep.subr.bf16.mxu0 0
  %880 = vmatpush1.bf16.msra.mxu0 0
  %881 = vmatprep.subr.bf16.mxu0 0
  %882 = vmatpush1.bf16.msra.mxu0 0
  %883 = vmatprep.subr.bf16.mxu0 0
  %884 = vmatpush1.bf16.msra.mxu0 0
  %885 = vmatprep.subr.bf16.mxu0 0
  %886 = vmatpush1.bf16.msra.mxu0 0
  %887 = vmatprep.subr.bf16.mxu0 0
  %888 = vmatpush1.bf16.msra.mxu0 0
  %889 = vmatprep.subr.bf16.mxu0 0
  %890 = vmatpush1.bf16.msra.mxu0 0
  %891 = vmatprep.subr.bf16.mxu0 0
  %892 = vmatpush1.bf16.msra.mxu0 0
  %893 = vmatprep.subr.bf16.mxu0 0
  %894 = vmatpush1.bf16.msra.mxu0 0
  %895 = vmatprep.subr.bf16.mxu0 0
  %896 = vmatpush1.bf16.msra.mxu0 0
  %897 = vmatprep.mubr.bf16.mxu0 0
  %898 = vmatmul.mubr.bf16.gmra.mrb[0].mxu0 %v168
  %v899 = vpop.f32.mrb[0].mxu0
  %v900 = vadd.f32 0.0, %v899
  %v901 = vpop.f32.mrb[0].mxu0
  %v902 = vpop.f32.mrb[0].mxu0
  %v903 = vpop.f32.mrb[0].mxu0
  %904 = vdwg.mxu0
  %v905 = vadd.f32 %v823, %v900
  %v906 = vmul.f32 %v905, 0.5
  %v907 = vtanh.pop %v906
  %v908 = vmul.f32 %v907, 0.5
  %v909 = vadd.f32 %v908, 0.5
  %v910 = vtanh.pop %v905
  %v911 = vmul.f32 %v909, 0.0
  %913 = vrot.lane.b32.xlu0 %v910, 64
  %v914 = vpop.permute.xlu0 %913
  %v916 = vmul.f32 %v909, %v914
  %918 = vrot.lane.b32.xlu0 %v916, 32
  %v919 = vpop.permute.xlu0 %918
  %v921 = vadd.f32 %v911, %v919
  %v922 = vtanh.pop %v921
  %924 = vrot.lane.b32.xlu0 %v922, 64
  %v925 = vpop.permute.xlu0 %924
  %v927 = vmul.f32 %v909, %v925
  %v928 = vpack.c.bf16 %v927, %v927
  %930 = vrot.lane.b32.xlu0 %v928, 32
  %v931 = vpop.permute.xlu0 %930
  %v933 = vsel %vm166, %v931, 0
  %935 = vmatprep.subr.bf16.mxu0 0
  %936 = vmatpush1.bf16.msra.mxu0 %v861
  %937 = vmatprep.subr.bf16.mxu0 0
  %938 = vmatpush1.bf16.msra.mxu0 %v862
  %939 = vmatprep.subr.bf16.mxu0 0
  %940 = vmatpush1.bf16.msra.mxu0 0
  %941 = vmatprep.subr.bf16.mxu0 0
  %942 = vmatpush1.bf16.msra.mxu0 0
  %943 = vmatprep.subr.bf16.mxu0 0
  %944 = vmatpush1.bf16.msra.mxu0 0
  %945 = vmatprep.subr.bf16.mxu0 0
  %946 = vmatpush1.bf16.msra.mxu0 0
  %947 = vmatprep.subr.bf16.mxu0 0
  %948 = vmatpush1.bf16.msra.mxu0 0
  %949 = vmatprep.subr.bf16.mxu0 0
  %950 = vmatpush1.bf16.msra.mxu0 0
  %951 = vmatprep.subr.bf16.mxu0 0
  %952 = vmatpush1.bf16.msra.mxu0 0
  %953 = vmatprep.subr.bf16.mxu0 0
  %954 = vmatpush1.bf16.msra.mxu0 0
  %955 = vmatprep.subr.bf16.mxu0 0
  %956 = vmatpush1.bf16.msra.mxu0 0
  %957 = vmatprep.subr.bf16.mxu0 0
  %958 = vmatpush1.bf16.msra.mxu0 0
  %959 = vmatprep.subr.bf16.mxu0 0
  %960 = vmatpush1.bf16.msra.mxu0 0
  %961 = vmatprep.subr.bf16.mxu0 0
  %962 = vmatpush1.bf16.msra.mxu0 0
  %963 = vmatprep.subr.bf16.mxu0 0
  %964 = vmatpush1.bf16.msra.mxu0 0
  %965 = vmatprep.subr.bf16.mxu0 0
  %966 = vmatpush1.bf16.msra.mxu0 0
  %967 = vmatprep.mubr.bf16.mxu0 0
  %968 = vmatmul.mubr.bf16.gmra.mrb[0].mxu0 %v933
  %v969 = vpop.f32.mrb[0].mxu0
  %v970 = vadd.f32 0.0, %v969
  %v971 = vpop.f32.mrb[0].mxu0
  %v972 = vpop.f32.mrb[0].mxu0
  %v973 = vpop.f32.mrb[0].mxu0
  %974 = vdwg.mxu0
  %v975 = vadd.f32 %v826, %v970
  %v976 = vmul.f32 %v975, 0.5
  %v977 = vtanh.pop %v976
  %v978 = vmul.f32 %v977, 0.5
  %v979 = vadd.f32 %v978, 0.5
  %v980 = vtanh.pop %v975
  %v981 = vmul.f32 %v979, %v921
  %983 = vrot.lane.b32.xlu0 %v980, 64
  %v984 = vpop.permute.xlu0 %983
  %v986 = vmul.f32 %v979, %v984
  %988 = vrot.lane.b32.xlu0 %v986, 32
  %v989 = vpop.permute.xlu0 %988
  %v991 = vadd.f32 %v981, %v989
  %v992 = vtanh.pop %v991
  %994 = vrot.lane.b32.xlu0 %v992, 64
  %v995 = vpop.permute.xlu0 %994
  %v997 = vmul.f32 %v979, %v995
  %v998 = vpack.c.bf16 %v997, %v997
  %1000 = vrot.lane.b32.xlu0 %v998, 32
  %v1001 = vpop.permute.xlu0 %1000
  %v1003 = vsel %vm166, %v1001, 0
  %1005 = vmatprep.subr.bf16.mxu0 0
  %1006 = vmatpush1.bf16.msra.mxu0 %v861
  %1007 = vmatprep.subr.bf16.mxu0 0
  %1008 = vmatpush1.bf16.msra.mxu0 %v862
  %1009 = vmatprep.subr.bf16.mxu0 0
  %1010 = vmatpush1.bf16.msra.mxu0 0
  %1011 = vmatprep.subr.bf16.mxu0 0
  %1012 = vmatpush1.bf16.msra.mxu0 0
  %1013 = vmatprep.subr.bf16.mxu0 0
  %1014 = vmatpush1.bf16.msra.mxu0 0
  %1015 = vmatprep.subr.bf16.mxu0 0
  %1016 = vmatpush1.bf16.msra.mxu0 0
  %1017 = vmatprep.subr.bf16.mxu0 0
  %1018 = vmatpush1.bf16.msra.mxu0 0
  %1019 = vmatprep.subr.bf16.mxu0 0
  %1020 = vmatpush1.bf16.msra.mxu0 0
  %1021 = vmatprep.subr.bf16.mxu0 0
  %1022 = vmatpush1.bf16.msra.mxu0 0
  %1023 = vmatprep.subr.bf16.mxu0 0
  %1024 = vmatpush1.bf16.msra.mxu0 0
  %1025 = vmatprep.subr.bf16.mxu0 0
  %1026 = vmatpush1.bf16.msra.mxu0 0
  %1027 = vmatprep.subr.bf16.mxu0 0
  %1028 = vmatpush1.bf16.msra.mxu0 0
  %1029 = vmatprep.subr.bf16.mxu0 0
  %1030 = vmatpush1.bf16.msra.mxu0 0
  %1031 = vmatprep.subr.bf16.mxu0 0
  %1032 = vmatpush1.bf16.msra.mxu0 0
  %1033 = vmatprep.subr.bf16.mxu0 0
  %1034 = vmatpush1.bf16.msra.mxu0 0
  %1035 = vmatprep.subr.bf16.mxu0 0
  %1036 = vmatpush1.bf16.msra.mxu0 0
  %1037 = vmatprep.mubr.bf16.mxu0 0
  %1038 = vmatmul.mubr.bf16.gmra.mrb[0].mxu0 %v1003
  %v1039 = vpop.f32.mrb[0].mxu0
  %v1040 = vadd.f32 0.0, %v1039
  %v1041 = vpop.f32.mrb[0].mxu0
  %v1042 = vpop.f32.mrb[0].mxu0
  %v1043 = vpop.f32.mrb[0].mxu0
  %1044 = vdwg.mxu0
  %v1045 = vadd.f32 %v831, %v1040
  %v1046 = vmul.f32 %v1045, 0.5
  %v1047 = vtanh.pop %v1046
  %v1048 = vmul.f32 %v1047, 0.5
  %v1049 = vadd.f32 %v1048, 0.5
  %v1050 = vtanh.pop %v1045
  %v1051 = vmul.f32 %v1049, %v991
  %1053 = vrot.lane.b32.xlu0 %v1050, 64
  %v1054 = vpop.permute.xlu0 %1053
  %v1056 = vmul.f32 %v1049, %v1054
  %1058 = vrot.lane.b32.xlu0 %v1056, 32
  %v1059 = vpop.permute.xlu0 %1058
  %v1061 = vadd.f32 %v1051, %v1059
  %v1062 = vtanh.pop %v1061
  %1064 = vrot.lane.b32.xlu0 %v1062, 64
  %v1065 = vpop.permute.xlu0 %1064
  %v1067 = vmul.f32 %v1049, %v1065
  %v1068 = vpack.c.bf16 %v1067, %v1067
  %1070 = vrot.lane.b32.xlu0 %v1068, 32
  %v1071 = vpop.permute.xlu0 %1070
  %v1073 = vsel %vm166, %v1071, 0
  %1075 = vmatprep.subr.bf16.mxu0 0
  %1076 = vmatpush1.bf16.msra.mxu0 %v861
  %1077 = vmatprep.subr.bf16.mxu0 0
  %1078 = vmatpush1.bf16.msra.mxu0 %v862
  %1079 = vmatprep.subr.bf16.mxu0 0
  %1080 = vmatpush1.bf16.msra.mxu0 0
  %1081 = vmatprep.subr.bf16.mxu0 0
  %1082 = vmatpush1.bf16.msra.mxu0 0
  %1083 = vmatprep.subr.bf16.mxu0 0
  %1084 = vmatpush1.bf16.msra.mxu0 0
  %1085 = vmatprep.subr.bf16.mxu0 0
  %1086 = vmatpush1.bf16.msra.mxu0 0
  %1087 = vmatprep.subr.bf16.mxu0 0
  %1088 = vmatpush1.bf16.msra.mxu0 0
  %1089 = vmatprep.subr.bf16.mxu0 0
  %1090 = vmatpush1.bf16.msra.mxu0 0
  %1091 = vmatprep.subr.bf16.mxu0 0
  %1092 = vmatpush1.bf16.msra.mxu0 0
  %1093 = vmatprep.subr.bf16.mxu0 0
  %1094 = vmatpush1.bf16.msra.mxu0 0
  %1095 = vmatprep.subr.bf16.mxu0 0
  %1096 = vmatpush1.bf16.msra.mxu0 0
  %1097 = vmatprep.subr.bf16.mxu0 0
  %1098 = vmatpush1.bf16.msra.mxu0 0
  %1099 = vmatprep.subr.bf16.mxu0 0
  %1100 = vmatpush1.bf16.msra.mxu0 0
  %1101 = vmatprep.subr.bf16.mxu0 0
  %1102 = vmatpush1.bf16.msra.mxu0 0
  %1103 = vmatprep.subr.bf16.mxu0 0
  %1104 = vmatpush1.bf16.msra.mxu0 0
  %1105 = vmatprep.subr.bf16.mxu0 0
  %1106 = vmatpush1.bf16.msra.mxu0 0
  %1107 = vmatprep.mubr.bf16.mxu0 0
  %1108 = vmatmul.mubr.bf16.gmra.mrb[0].mxu0 %v1073
  %v1109 = vpop.f32.mrb[0].mxu0
  %v1110 = vadd.f32 0.0, %v1109
  %v1111 = vpop.f32.mrb[0].mxu0
  %v1112 = vpop.f32.mrb[0].mxu0
  %v1113 = vpop.f32.mrb[0].mxu0
  %1114 = vdwg.mxu0
  %v1115 = vadd.f32 %v834, %v1110
  %v1116 = vmul.f32 %v1115, 0.5
  %v1117 = vtanh.pop %v1116
  %v1118 = vmul.f32 %v1117, 0.5
  %v1119 = vadd.f32 %v1118, 0.5
  %v1120 = vtanh.pop %v1115
  %v1121 = vmul.f32 %v1119, %v1061
  %1123 = vrot.lane.b32.xlu0 %v1120, 64
  %v1124 = vpop.permute.xlu0 %1123
  %v1126 = vmul.f32 %v1119, %v1124
  %1128 = vrot.lane.b32.xlu0 %v1126, 32
  %v1129 = vpop.permute.xlu0 %1128
  %v1131 = vadd.f32 %v1121, %v1129
  %v1132 = vtanh.pop %v1131
  %1134 = vrot.lane.b32.xlu0 %v1132, 64
  %v1135 = vpop.permute.xlu0 %1134
  %v1137 = vmul.f32 %v1119, %v1135
  %v1138 = vpack.c.bf16 %v1137, %v1137
  %1140 = vrot.lane.b32.xlu0 %v1138, 32
  %v1141 = vpop.permute.xlu0 %1140
  %v1143 = vsel %vm166, %v1141, 0
  %1145 = vmatprep.subr.bf16.mxu0 0
  %1146 = vmatpush1.bf16.msra.mxu0 %v861
  %1147 = vmatprep.subr.bf16.mxu0 0
  %1148 = vmatpush1.bf16.msra.mxu0 %v862
  %1149 = vmatprep.subr.bf16.mxu0 0
  %1150 = vmatpush1.bf16.msra.mxu0 0
  %1151 = vmatprep.subr.bf16.mxu0 0
  %1152 = vmatpush1.bf16.msra.mxu0 0
  %1153 = vmatprep.subr.bf16.mxu0 0
  %1154 = vmatpush1.bf16.msra.mxu0 0
  %1155 = vmatprep.subr.bf16.mxu0 0
  %1156 = vmatpush1.bf16.msra.mxu0 0
  %1157 = vmatprep.subr.bf16.mxu0 0
  %1158 = vmatpush1.bf16.msra.mxu0 0
  %1159 = vmatprep.subr.bf16.mxu0 0
  %1160 = vmatpush1.bf16.msra.mxu0 0
  %1161 = vmatprep.subr.bf16.mxu0 0
  %1162 = vmatpush1.bf16.msra.mxu0 0
  %1163 = vmatprep.subr.bf16.mxu0 0
  %1164 = vmatpush1.bf16.msra.mxu0 0
  %1165 = vmatprep.subr.bf16.mxu0 0
  %1166 = vmatpush1.bf16.msra.mxu0 0
  %1167 = vmatprep.subr.bf16.mxu0 0
  %1168 = vmatpush1.bf16.msra.mxu0 0
  %1169 = vmatprep.subr.bf16.mxu0 0
  %1170 = vmatpush1.bf16.msra.mxu0 0
  %1171 = vmatprep.subr.bf16.mxu0 0
  %1172 = vmatpush1.bf16.msra.mxu0 0
  %1173 = vmatprep.subr.bf16.mxu0 0
  %1174 = vmatpush1.bf16.msra.mxu0 0
  %1175 = vmatprep.subr.bf16.mxu0 0
  %1176 = vmatpush1.bf16.msra.mxu0 0
  %1177 = vmatprep.mubr.bf16.mxu0 0
  %1178 = vmatmul.mubr.bf16.gmra.mrb[0].mxu0 %v1143
  %v1179 = vpop.f32.mrb[0].mxu0
  %v1180 = vadd.f32 0.0, %v1179
  %v1181 = vpop.f32.mrb[0].mxu0
  %v1182 = vpop.f32.mrb[0].mxu0
  %v1183 = vpop.f32.mrb[0].mxu0
  %1184 = vdwg.mxu0
  %v1185 = vadd.f32 %v839, %v1180
  %v1186 = vmul.f32 %v1185, 0.5
  %v1187 = vtanh.pop %v1186
  %v1188 = vmul.f32 %v1187, 0.5
  %v1189 = vadd.f32 %v1188, 0.5
  %v1190 = vtanh.pop %v1185
  %v1191 = vmul.f32 %v1189, %v1131
  %1193 = vrot.lane.b32.xlu0 %v1190, 64
  %v1194 = vpop.permute.xlu0 %1193
  %v1196 = vmul.f32 %v1189, %v1194
  %1198 = vrot.lane.b32.xlu0 %v1196, 32
  %v1199 = vpop.permute.xlu0 %1198
  %v1201 = vadd.f32 %v1191, %v1199
  %v1202 = vtanh.pop %v1201
  %1204 = vrot.lane.b32.xlu0 %v1202, 64
  %v1205 = vpop.permute.xlu0 %1204
  %v1207 = vmul.f32 %v1189, %v1205
  %v1208 = vpack.c.bf16 %v1207, %v1207
  %1210 = vrot.lane.b32.xlu0 %v1208, 32
  %v1211 = vpop.permute.xlu0 %1210
  %v1213 = vsel %vm166, %v1211, 0
  %1215 = vmatprep.subr.bf16.mxu0 0
  %1216 = vmatpush1.bf16.msra.mxu0 %v861
  %1217 = vmatprep.subr.bf16.mxu0 0
  %1218 = vmatpush1.bf16.msra.mxu0 %v862
  %1219 = vmatprep.subr.bf16.mxu0 0
  %1220 = vmatpush1.bf16.msra.mxu0 0
  %1221 = vmatprep.subr.bf16.mxu0 0
  %1222 = vmatpush1.bf16.msra.mxu0 0
  %1223 = vmatprep.subr.bf16.mxu0 0
  %1224 = vmatpush1.bf16.msra.mxu0 0
  %1225 = vmatprep.subr.bf16.mxu0 0
  %1226 = vmatpush1.bf16.msra.mxu0 0
  %1227 = vmatprep.subr.bf16.mxu0 0
  %1228 = vmatpush1.bf16.msra.mxu0 0
  %1229 = vmatprep.subr.bf16.mxu0 0
  %1230 = vmatpush1.bf16.msra.mxu0 0
  %1231 = vmatprep.subr.bf16.mxu0 0
  %1232 = vmatpush1.bf16.msra.mxu0 0
  %1233 = vmatprep.subr.bf16.mxu0 0
  %1234 = vmatpush1.bf16.msra.mxu0 0
  %1235 = vmatprep.subr.bf16.mxu0 0
  %1236 = vmatpush1.bf16.msra.mxu0 0
  %1237 = vmatprep.subr.bf16.mxu0 0
  %1238 = vmatpush1.bf16.msra.mxu0 0
  %1239 = vmatprep.subr.bf16.mxu0 0
  %1240 = vmatpush1.bf16.msra.mxu0 0
  %1241 = vmatprep.subr.bf16.mxu0 0
  %1242 = vmatpush1.bf16.msra.mxu0 0
  %1243 = vmatprep.subr.bf16.mxu0 0
  %1244 = vmatpush1.bf16.msra.mxu0 0
  %1245 = vmatprep.subr.bf16.mxu0 0
  %1246 = vmatpush1.bf16.msra.mxu0 0
  %1247 = vmatprep.mubr.bf16.mxu0 0
  %1248 = vmatmul.mubr.bf16.gmra.mrb[0].mxu0 %v1213
  %v1249 = vpop.f32.mrb[0].mxu0
  %v1250 = vadd.f32 0.0, %v1249
  %v1251 = vpop.f32.mrb[0].mxu0
  %v1252 = vpop.f32.mrb[0].mxu0
  %v1253 = vpop.f32.mrb[0].mxu0
  %1254 = vdwg.mxu0
  %v1255 = vadd.f32 %v842, %v1250
  %v1256 = vmul.f32 %v1255, 0.5
  %v1257 = vtanh.pop %v1256
  %v1258 = vmul.f32 %v1257, 0.5
  %v1259 = vadd.f32 %v1258, 0.5
  %v1260 = vtanh.pop %v1255
  %v1261 = vmul.f32 %v1259, %v1201
  %1263 = vrot.lane.b32.xlu0 %v1260, 64
  %v1264 = vpop.permute.xlu0 %1263
  %v1266 = vmul.f32 %v1259, %v1264
  %1268 = vrot.lane.b32.xlu0 %v1266, 32
  %v1269 = vpop.permute.xlu0 %1268
  %v1271 = vadd.f32 %v1261, %v1269
  %v1272 = vtanh.pop %v1271
  %1274 = vrot.lane.b32.xlu0 %v1272, 64
  %v1275 = vpop.permute.xlu0 %1274
  %v1277 = vmul.f32 %v1259, %v1275
  %v1278 = vpack.c.bf16 %v1277, %v1277
  %1280 = vrot.lane.b32.xlu0 %v1278, 32
  %v1281 = vpop.permute.xlu0 %1280
  %v1283 = vsel %vm166, %v1281, 0
  %1285 = vmatprep.subr.bf16.mxu0 0
  %1286 = vmatpush1.bf16.msra.mxu0 %v861
  %1287 = vmatprep.subr.bf16.mxu0 0
  %1288 = vmatpush1.bf16.msra.mxu0 %v862
  %1289 = vmatprep.subr.bf16.mxu0 0
  %1290 = vmatpush1.bf16.msra.mxu0 0
  %1291 = vmatprep.subr.bf16.mxu0 0
  %1292 = vmatpush1.bf16.msra.mxu0 0
  %1293 = vmatprep.subr.bf16.mxu0 0
  %1294 = vmatpush1.bf16.msra.mxu0 0
  %1295 = vmatprep.subr.bf16.mxu0 0
  %1296 = vmatpush1.bf16.msra.mxu0 0
  %1297 = vmatprep.subr.bf16.mxu0 0
  %1298 = vmatpush1.bf16.msra.mxu0 0
  %1299 = vmatprep.subr.bf16.mxu0 0
  %1300 = vmatpush1.bf16.msra.mxu0 0
  %1301 = vmatprep.subr.bf16.mxu0 0
  %1302 = vmatpush1.bf16.msra.mxu0 0
  %1303 = vmatprep.subr.bf16.mxu0 0
  %1304 = vmatpush1.bf16.msra.mxu0 0
  %1305 = vmatprep.subr.bf16.mxu0 0
  %1306 = vmatpush1.bf16.msra.mxu0 0
  %1307 = vmatprep.subr.bf16.mxu0 0
  %1308 = vmatpush1.bf16.msra.mxu0 0
  %1309 = vmatprep.subr.bf16.mxu0 0
  %1310 = vmatpush1.bf16.msra.mxu0 0
  %1311 = vmatprep.subr.bf16.mxu0 0
  %1312 = vmatpush1.bf16.msra.mxu0 0
  %1313 = vmatprep.subr.bf16.mxu0 0
  %1314 = vmatpush1.bf16.msra.mxu0 0
  %1315 = vmatprep.subr.bf16.mxu0 0
  %1316 = vmatpush1.bf16.msra.mxu0 0
  %1317 = vmatprep.mubr.bf16.mxu0 0
  %1318 = vmatmul.mubr.bf16.gmra.mrb[0].mxu0 %v1283
  %v1319 = vpop.f32.mrb[0].mxu0
  %v1320 = vadd.f32 0.0, %v1319
  %v1321 = vpop.f32.mrb[0].mxu0
  %v1322 = vpop.f32.mrb[0].mxu0
  %v1323 = vpop.f32.mrb[0].mxu0
  %1324 = vdwg.mxu0
  %v1325 = vadd.f32 %v847, %v1320
  %v1326 = vmul.f32 %v1325, 0.5
  %v1327 = vtanh.pop %v1326
  %v1328 = vmul.f32 %v1327, 0.5
  %v1329 = vadd.f32 %v1328, 0.5
  %v1330 = vtanh.pop %v1325
  %v1331 = vmul.f32 %v1329, %v1271
  %1333 = vrot.lane.b32.xlu0 %v1330, 64
  %v1334 = vpop.permute.xlu0 %1333
  %v1336 = vmul.f32 %v1329, %v1334
  %1338 = vrot.lane.b32.xlu0 %v1336, 32
  %v1339 = vpop.permute.xlu0 %1338
  %v1341 = vadd.f32 %v1331, %v1339
  %v1342 = vtanh.pop %v1341
  %1344 = vrot.lane.b32.xlu0 %v1342, 64
  %v1345 = vpop.permute.xlu0 %1344
  %v1347 = vmul.f32 %v1329, %v1345
  %v1348 = vpack.c.bf16 %v1347, %v1347
  %1350 = vrot.lane.b32.xlu0 %v1348, 32
  %v1351 = vpop.permute.xlu0 %1350
  %v1353 = vsel %vm166, %v1351, 0
  %1355 = vmatprep.subr.bf16.mxu0 0
  %1356 = vmatpush1.bf16.msra.mxu0 %v861
  %1357 = vmatprep.subr.bf16.mxu0 0
  %1358 = vmatpush1.bf16.msra.mxu0 %v862
  %1359 = vmatprep.subr.bf16.mxu0 0
  %1360 = vmatpush1.bf16.msra.mxu0 0
  %1361 = vmatprep.subr.bf16.mxu0 0
  %1362 = vmatpush1.bf16.msra.mxu0 0
  %1363 = vmatprep.subr.bf16.mxu0 0
  %1364 = vmatpush1.bf16.msra.mxu0 0
  %1365 = vmatprep.subr.bf16.mxu0 0
  %1366 = vmatpush1.bf16.msra.mxu0 0
  %1367 = vmatprep.subr.bf16.mxu0 0
  %1368 = vmatpush1.bf16.msra.mxu0 0
  %1369 = vmatprep.subr.bf16.mxu0 0
  %1370 = vmatpush1.bf16.msra.mxu0 0
  %1371 = vmatprep.subr.bf16.mxu0 0
  %1372 = vmatpush1.bf16.msra.mxu0 0
  %1373 = vmatprep.subr.bf16.mxu0 0
  %1374 = vmatpush1.bf16.msra.mxu0 0
  %1375 = vmatprep.subr.bf16.mxu0 0
  %1376 = vmatpush1.bf16.msra.mxu0 0
  %1377 = vmatprep.subr.bf16.mxu0 0
  %1378 = vmatpush1.bf16.msra.mxu0 0
  %1379 = vmatprep.subr.bf16.mxu0 0
  %1380 = vmatpush1.bf16.msra.mxu0 0
  %1381 = vmatprep.subr.bf16.mxu0 0
  %1382 = vmatpush1.bf16.msra.mxu0 0
  %1383 = vmatprep.subr.bf16.mxu0 0
  %1384 = vmatpush1.bf16.msra.mxu0 0
  %1385 = vmatprep.subr.bf16.mxu0 0
  %1386 = vmatpush1.bf16.msra.mxu0 0
  %1387 = vmatprep.mubr.bf16.mxu0 0
  %1388 = vmatmul.mubr.bf16.gmra.mrb[0].mxu0 %v1353
  %v1389 = vpop.f32.mrb[0].mxu0
  %v1390 = vadd.f32 0.0, %v1389
  %v1391 = vpop.f32.mrb[0].mxu0
  %v1392 = vpop.f32.mrb[0].mxu0
  %v1393 = vpop.f32.mrb[0].mxu0
  %1394 = vdwg.mxu0
  %v1395 = vadd.f32 %v850, %v1390
  %v1396 = vmul.f32 %v1395, 0.5
  %v1397 = vtanh.pop %v1396
  %v1398 = vmul.f32 %v1397, 0.5
  %v1399 = vadd.f32 %v1398, 0.5
  %v1400 = vtanh.pop %v1395
  %v1401 = vmul.f32 %v1399, %v1341
  %1403 = vrot.lane.b32.xlu0 %v1400, 64
  %v1404 = vpop.permute.xlu0 %1403
  %v1406 = vmul.f32 %v1399, %v1404
  %1408 = vrot.lane.b32.xlu0 %v1406, 32
  %v1409 = vpop.permute.xlu0 %1408
  %v1411 = vadd.f32 %v1401, %v1409
  %v1412 = vtanh.pop %v1411
  %1414 = vrot.lane.b32.xlu0 %v1412, 64
  %v1415 = vpop.permute.xlu0 %1414
  %v1417 = vmul.f32 %v1399, %v1415
  %1419 = vrot.lane.b32.xlu0 %v1417, 32
  %v1420 = vpop.permute.xlu0 %1419
  %s1422 = scalar_lea.vmem %s7, 8
  %1423 = vst.msk [vmem:[%s1422] sm:$0xff] %vm166, %v1420
  %1425 = vrot.lane.b32.xlu0 %v1411, 96
  %v1426 = vpop.permute.xlu0 %1425
  %s1428 = scalar_lea.vmem %s8, 8
  %1429 = vst.msk [vmem:[%s1428] sm:$0xff] %vm166, %v1426
  // Predicated region
  $region30: #{lstm_encoder_forward.1} parent=0 // pred_check
    _
  $region31: #{lstm_encoder_forward.1} parent=0 // pred_check_branch
    %1431 = sbr.rel (0) target = $region33
  $region32: #{lstm_encoder_forward.1} parent=0 // pred_region
    _
  $region33: #{lstm_encoder_forward.1} parent=0 // pred_fallthru
    _
  // Predicated region
  $region34: #{lstm_encoder_forward.1} parent=0 // pred_check
    _
  $region35: #{lstm_encoder_forward.1} parent=0 // pred_check_branch
    %1433 = sbr.rel (0) target = $region37
  $region36: #{lstm_encoder_forward.1} parent=0 // pred_region
    _
  $region37: #{lstm_encoder_forward.1} parent=0 // pred_fallthru
    _
  // Predicated region
  $region38: #{lstm_encoder_forward.1} parent=0 // pred_check
    _
  $region39: #{lstm_encoder_forward.1} parent=0 // pred_check_branch
    %1435 = sbr.rel (0) target = $region41
  $region40: #{lstm_encoder_forward.1} parent=0 // pred_region
    _
  $region41: #{lstm_encoder_forward.1} parent=0 // pred_fallthru
    _
  // Predicated region
  $region42: #{lstm_encoder_forward.1} parent=0 // pred_check
    _
  $region43: #{lstm_encoder_forward.1} parent=0 // pred_check_branch
    %1437 = sbr.rel (0) target = $region45
  $region44: #{lstm_encoder_forward.1} parent=0 // pred_region
    _
  $region45: #{lstm_encoder_forward.1} parent=0 // pred_fallthru
    _

</llo_original>
